<compile_context>
chip_gen: v7x
topology: tpu7x:2x2x1
jax: 0.10.0
libtpu: 0.0.40
codegen_flags: <defaults>
</compile_context>

<pallas_src>
import functools

import jax
import jax.numpy as jnp
from jax.experimental import pallas as pl
from jax.experimental.pallas import tpu as pltpu

WIDTH_PAD = 128   # lane/sublane padding for the hidden feature dim (20 -> 128)


def pinn_mlp_kernel(xt_ref, w_ref, b_ref, o_ref):
    """Full MLP for one batch tile, feature-major layout.

    xt_ref: (2, TM)          packed [x; t] rows for this tile (f32)
    w_ref : (L, 128, 128)    zero-padded weights, bf16.
                             layers 0..L-2 stored as (out, in);
                             layer  L-1   stored as (in, out) (col 0 real).
    b_ref : (L, 128, 1)      zero-padded biases, f32 (per-output-feature rows)
    o_ref : (1, TM)          lane-dense output row
    """
    n_layers = w_ref.shape[0]

    # Layer 0: (20,2) @ (2,TM) expressed as two broadcast FMAs on the VPU —
    # avoids a degenerate K=2 MXU matmul.  Weight slices are tiny; cast the
    # two real columns back to f32 at use.
    w0 = w_ref[0]
    wx = w0[:, 0:1].astype(jnp.float32)            # (128, 1)
    wt = w0[:, 1:2].astype(jnp.float32)            # (128, 1)
    x_row = xt_ref[0:1, :]                         # (1, TM)
    t_row = xt_ref[1:2, :]                         # (1, TM)
    h = jnp.tanh(wx * x_row + wt * t_row + b_ref[0])          # (128, TM) f32

    # Hidden layers: (128,128) bf16 x (128,TM) bf16 MXU tiles, f32 accumulate,
    # bias add + tanh in f32 on VPU/EUP.
    for i in range(1, n_layers - 1):
        acc = jnp.dot(w_ref[i], h.astype(jnp.bfloat16),
                      preferred_element_type=jnp.float32)      # (128, TM) f32
        h = jnp.tanh(acc + b_ref[i])

    # Final linear layer: only one real output feature, so skip the MXU and do
    # a VPU multiply by the single real weight column + sublane reduction.
    w_col = w_ref[n_layers - 1][:, 0:1].astype(jnp.float32)    # (128, 1)
    b_last = b_ref[n_layers - 1][0:1, :]                       # (1, 1)
    o_ref[...] = jnp.sum(h * w_col, axis=0, keepdims=True) + b_last


def _pad_weight_square(w):
    """Zero-pad a 2-D weight to (128, 128) f32."""
    out = jnp.zeros((WIDTH_PAD, WIDTH_PAD), jnp.float32)
    return out.at[: w.shape[0], : w.shape[1]].set(w.astype(jnp.float32))


def _pad_bias_col(b):
    """Zero-pad a 1-D bias to a (128, 1) f32 column."""
    out = jnp.zeros((WIDTH_PAD, 1), jnp.float32)
    return out.at[: b.shape[0], 0].set(b.astype(jnp.float32))


def _pick_tm(n):
    """Largest batch tile in {4096,...,512} that keeps at least 2 grid steps
    (so both v7x TensorCores get a tile); falls back to 512 for tiny N."""
    for tm in (4096, 2048, 1024, 512):
        if pl.cdiv(n, tm) >= 2:
            return tm
    return 512


@functools.partial(jax.jit, static_argnames=("tm",))
def pinn_forward(x, t, weights, biases, *, tm=None):
    """x: (N,1), t: (N,1). weights[i]: (in_i, out_i), biases[i]: (out_i,)."""
    n = x.shape[0]
    num_layers = len(weights)
    if tm is None:
        tm = _pick_tm(n)

    n_pad = pl.cdiv(n, tm) * tm

    # Build the feature-major (2, n_pad) input directly (no concat+pad
    # round-trip through an (N, 2) intermediate).
    xt_t = jnp.zeros((2, n_pad), jnp.float32)
    xt_t = xt_t.at[0, :n].set(x[:, 0].astype(jnp.float32))
    xt_t = xt_t.at[1, :n].set(t[:, 0].astype(jnp.float32))

    # Weight stack (bf16, resident in VMEM):
    #   layers 0..L-2 in (out, in) layout so the kernel computes W @ h;
    #   last layer kept as (in, out) so its single real column broadcasts
    #   against feature-major h for the VPU reduce.
    w_list = [_pad_weight_square(w.T) for w in weights[:-1]]
    w_list.append(_pad_weight_square(weights[-1]))
    w_stack = jnp.stack(w_list).astype(jnp.bfloat16)          # (L, 128, 128)
    b_stack = jnp.stack([_pad_bias_col(b) for b in biases])   # (L, 128, 1) f32

    out = pl.pallas_call(
        pinn_mlp_kernel,
        out_shape=jax.ShapeDtypeStruct((1, n_pad), jnp.float32),
        grid_spec=pltpu.PrefetchScalarGridSpec(
            num_scalar_prefetch=0,
            grid=(n_pad // tm,),
            in_specs=[
                # feature-major (2, tm) input tile; dim -2 equals the full
                # array extent (2), dim -1 is a multiple of 128.
                pl.BlockSpec((2, tm), lambda i: (0, i)),
                # weight / bias stacks: constant block index -> fetched once,
                # resident in VMEM across the whole grid.
                pl.BlockSpec((num_layers, WIDTH_PAD, WIDTH_PAD),
                             lambda i: (0, 0, 0)),
                pl.BlockSpec((num_layers, WIDTH_PAD, 1),
                             lambda i: (0, 0, 0)),
            ],
            # lane-dense (1, tm) output tile: full-width vst, no masked stores.
            out_specs=pl.BlockSpec((1, tm), lambda i: (0, i)),
        ),
        compiler_params=pltpu.CompilerParams(
            dimension_semantics=("parallel",)),   # megacore across batch tiles
    )(xt_t, w_stack, b_stack)

    # Transpose back to the PyTorch (N, 1) shape; free for a (1, N) array.
    return out[0, :n].reshape(n, 1)


def init_pinn_params(key, n_layers=5, width=20, inputs=2, outputs=1):
    """Deterministic PyTorch-style init: U(-1/sqrt(fan_in), 1/sqrt(fan_in))."""
    dims = [inputs] + [width] * (n_layers - 1) + [outputs]
    weights, biases = [], []
    for fan_in, fan_out in zip(dims[:-1], dims[1:]):
        key, kw, kb = jax.random.split(key, 3)
        bound = 1.0 / jnp.sqrt(fan_in)
        # stored as (in, out); the wrapper re-lays-out for the kernel
        weights.append(jax.random.uniform(
            kw, (fan_in, fan_out), jnp.float32, -bound, bound))
        biases.append(jax.random.uniform(
            kb, (fan_out,), jnp.float32, -bound, bound))
    return tuple(weights), tuple(biases)


def _reference_forward(x, t, weights, biases):
    """Pure-JAX f32 reference at HIGHEST matmul precision."""
    h = jnp.concatenate([x, t], axis=1)
    for w, b in zip(weights[:-1], biases[:-1]):
        h = jnp.tanh(jnp.dot(h, w, precision=jax.lax.Precision.HIGHEST) + b)
    return jnp.dot(h, weights[-1],
                   precision=jax.lax.Precision.HIGHEST) + biases[-1]


if __name__ == "__main__":
    key = jax.random.PRNGKey(0)
    key, kx, kt = jax.random.split(key, 3)

    # Small batch of collocation points.  Deliberately not a multiple of the
    # batch tile (exercises the padded tail); auto-picked tm=512 gives grid=2
    # so both v7x TensorCores get a tile.
    N = 1000
    x = jax.random.normal(kx, (N, 1), jnp.float32)
    t = jax.random.normal(kt, (N, 1), jnp.float32)

    weights, biases = init_pinn_params(key, n_layers=5, width=20,
                                       inputs=2, outputs=1)

    y = pinn_forward(x, t, weights, biases)
    y = jax.block_until_ready(y)

    y_ref = _reference_forward(x, t, weights, biases)
    assert y.shape == (N, 1)
    # Tolerance gates the bf16-operand MXU path (f32 accumulation) against the
    # exact-f32 reference; observed error is a few 1e-3 for this 5-layer net.
    # TODO(synk): if this forward is reused inside PINN training (higher-order
    # autodiff through tanh), re-gate accuracy or switch the dots back to f32.
    assert jnp.allclose(y, y_ref, atol=2e-2, rtol=2e-2)

    print("KERNEL_OK")
</pallas_src>

<mosaic_0001>
module attributes {stable_mosaic.version = 11 : i64} {
  func.func @pinn_mlp_kernel(%arg0: i32, %arg1: memref<2x512xf32, #tpu.memory_space<vmem>>, %arg2: memref<5x128x128xbf16, #tpu.memory_space<vmem>>, %arg3: memref<5x128x1xf32, #tpu.memory_space<vmem>>, %arg4: memref<1x512xf32, #tpu.memory_space<vmem>>) attributes {dimension_semantics = [#tpu.dimension_semantics<parallel>], iteration_bounds = array<i64: 2>, scalar_prefetch = 0 : i64, scratch_operands = 0 : i64, tpu.core_type = #tpu.core_type<tc>, window_params = [{transform_indices = @transform_0, window_bounds = array<i64: 2, 512>}, {pipeline_mode = #tpu.pipeline_mode<synchronous>, transform_indices = @transform_1, window_bounds = array<i64: 5, 128, 128>}, {pipeline_mode = #tpu.pipeline_mode<synchronous>, transform_indices = @transform_2, window_bounds = array<i64: 5, 128, 1>}, {transform_indices = @transform_3, window_bounds = array<i64: 1, 512>}]} {
    %c0 = arith.constant 0 : index
    %c0_0 = arith.constant 0 : index
    %c0_1 = arith.constant 0 : index
    %0 = vector.load %arg2[%c0, %c0_0, %c0_1] : memref<5x128x128xbf16, #tpu.memory_space<vmem>>, vector<1x128x128xbf16>
    %1 = vector.shape_cast %0 : vector<1x128x128xbf16> to vector<128x128xbf16>
    %2 = vector.extract_strided_slice %1 {offsets = [0, 0], sizes = [128, 1], strides = [1, 1]} : vector<128x128xbf16> to vector<128x1xbf16>
    %3 = arith.extf %2 : vector<128x1xbf16> to vector<128x1xf32>
    %4 = vector.extract_strided_slice %1 {offsets = [0, 1], sizes = [128, 1], strides = [1, 1]} : vector<128x128xbf16> to vector<128x1xbf16>
    %5 = arith.extf %4 : vector<128x1xbf16> to vector<128x1xf32>
    %c0_2 = arith.constant 0 : index
    %c0_3 = arith.constant 0 : index
    %6 = vector.load %arg1[%c0_2, %c0_3] : memref<2x512xf32, #tpu.memory_space<vmem>>, vector<1x512xf32>
    %c1 = arith.constant 1 : index
    %c0_4 = arith.constant 0 : index
    %7 = vector.load %arg1[%c1, %c0_4] : memref<2x512xf32, #tpu.memory_space<vmem>>, vector<1x512xf32>
    %8 = vector.broadcast %3 : vector<128x1xf32> to vector<128x512xf32>
    %9 = vector.broadcast %6 : vector<1x512xf32> to vector<128x512xf32>
    %10 = arith.mulf %8, %9 : vector<128x512xf32>
    %11 = vector.broadcast %5 : vector<128x1xf32> to vector<128x512xf32>
    %12 = vector.broadcast %7 : vector<1x512xf32> to vector<128x512xf32>
    %13 = arith.mulf %11, %12 : vector<128x512xf32>
    %14 = arith.addf %10, %13 : vector<128x512xf32>
    %c0_5 = arith.constant 0 : index
    %c0_6 = arith.constant 0 : index
    %c0_7 = arith.constant 0 : index
    %15 = vector.load %arg3[%c0_5, %c0_6, %c0_7] : memref<5x128x1xf32, #tpu.memory_space<vmem>>, vector<1x128x1xf32>
    %16 = vector.shape_cast %15 : vector<1x128x1xf32> to vector<128x1xf32>
    %17 = vector.broadcast %16 : vector<128x1xf32> to vector<128x512xf32>
    %18 = arith.addf %14, %17 : vector<128x512xf32>
    %19 = math.tanh %18 : vector<128x512xf32>
    %c1_8 = arith.constant 1 : index
    %c0_9 = arith.constant 0 : index
    %c0_10 = arith.constant 0 : index
    %20 = vector.load %arg2[%c1_8, %c0_9, %c0_10] : memref<5x128x128xbf16, #tpu.memory_space<vmem>>, vector<1x128x128xbf16>
    %21 = vector.shape_cast %20 : vector<1x128x128xbf16> to vector<128x128xbf16>
    %22 = arith.truncf %19 : vector<128x512xf32> to vector<128x512xbf16>
    %cst = arith.constant dense<0.000000e+00> : vector<128x512xf32>
    %23 = tpu.matmul %21, %22, %cst {dimension_numbers = #tpu.dot_dimension_numbers<[1], [0], [0], [1], [0, 0, 1, 1], [], []>} : vector<128x128xbf16>, vector<128x512xbf16>, vector<128x512xf32> -> vector<128x512xf32>
    %c1_11 = arith.constant 1 : index
    %c0_12 = arith.constant 0 : index
    %c0_13 = arith.constant 0 : index
    %24 = vector.load %arg3[%c1_11, %c0_12, %c0_13] : memref<5x128x1xf32, #tpu.memory_space<vmem>>, vector<1x128x1xf32>
    %25 = vector.shape_cast %24 : vector<1x128x1xf32> to vector<128x1xf32>
    %26 = vector.broadcast %25 : vector<128x1xf32> to vector<128x512xf32>
    %27 = arith.addf %23, %26 : vector<128x512xf32>
    %28 = math.tanh %27 : vector<128x512xf32>
    %c2 = arith.constant 2 : index
    %c0_14 = arith.constant 0 : index
    %c0_15 = arith.constant 0 : index
    %29 = vector.load %arg2[%c2, %c0_14, %c0_15] : memref<5x128x128xbf16, #tpu.memory_space<vmem>>, vector<1x128x128xbf16>
    %30 = vector.shape_cast %29 : vector<1x128x128xbf16> to vector<128x128xbf16>
    %31 = arith.truncf %28 : vector<128x512xf32> to vector<128x512xbf16>
    %cst_16 = arith.constant dense<0.000000e+00> : vector<128x512xf32>
    %32 = tpu.matmul %30, %31, %cst_16 {dimension_numbers = #tpu.dot_dimension_numbers<[1], [0], [0], [1], [0, 0, 1, 1], [], []>} : vector<128x128xbf16>, vector<128x512xbf16>, vector<128x512xf32> -> vector<128x512xf32>
    %c2_17 = arith.constant 2 : index
    %c0_18 = arith.constant 0 : index
    %c0_19 = arith.constant 0 : index
    %33 = vector.load %arg3[%c2_17, %c0_18, %c0_19] : memref<5x128x1xf32, #tpu.memory_space<vmem>>, vector<1x128x1xf32>
    %34 = vector.shape_cast %33 : vector<1x128x1xf32> to vector<128x1xf32>
    %35 = vector.broadcast %34 : vector<128x1xf32> to vector<128x512xf32>
    %36 = arith.addf %32, %35 : vector<128x512xf32>
    %37 = math.tanh %36 : vector<128x512xf32>
    %c3 = arith.constant 3 : index
    %c0_20 = arith.constant 0 : index
    %c0_21 = arith.constant 0 : index
    %38 = vector.load %arg2[%c3, %c0_20, %c0_21] : memref<5x128x128xbf16, #tpu.memory_space<vmem>>, vector<1x128x128xbf16>
    %39 = vector.shape_cast %38 : vector<1x128x128xbf16> to vector<128x128xbf16>
    %40 = arith.truncf %37 : vector<128x512xf32> to vector<128x512xbf16>
    %cst_22 = arith.constant dense<0.000000e+00> : vector<128x512xf32>
    %41 = tpu.matmul %39, %40, %cst_22 {dimension_numbers = #tpu.dot_dimension_numbers<[1], [0], [0], [1], [0, 0, 1, 1], [], []>} : vector<128x128xbf16>, vector<128x512xbf16>, vector<128x512xf32> -> vector<128x512xf32>
    %c3_23 = arith.constant 3 : index
    %c0_24 = arith.constant 0 : index
    %c0_25 = arith.constant 0 : index
    %42 = vector.load %arg3[%c3_23, %c0_24, %c0_25] : memref<5x128x1xf32, #tpu.memory_space<vmem>>, vector<1x128x1xf32>
    %43 = vector.shape_cast %42 : vector<1x128x1xf32> to vector<128x1xf32>
    %44 = vector.broadcast %43 : vector<128x1xf32> to vector<128x512xf32>
    %45 = arith.addf %41, %44 : vector<128x512xf32>
    %46 = math.tanh %45 : vector<128x512xf32>
    %c4 = arith.constant 4 : index
    %c0_26 = arith.constant 0 : index
    %c0_27 = arith.constant 0 : index
    %47 = vector.load %arg2[%c4, %c0_26, %c0_27] : memref<5x128x128xbf16, #tpu.memory_space<vmem>>, vector<1x128x128xbf16>
    %48 = vector.shape_cast %47 : vector<1x128x128xbf16> to vector<128x128xbf16>
    %49 = vector.extract_strided_slice %48 {offsets = [0, 0], sizes = [128, 1], strides = [1, 1]} : vector<128x128xbf16> to vector<128x1xbf16>
    %50 = arith.extf %49 : vector<128x1xbf16> to vector<128x1xf32>
    %c4_28 = arith.constant 4 : index
    %c0_29 = arith.constant 0 : index
    %c0_30 = arith.constant 0 : index
    %51 = vector.load %arg3[%c4_28, %c0_29, %c0_30] : memref<5x128x1xf32, #tpu.memory_space<vmem>>, vector<1x128x1xf32>
    %52 = vector.shape_cast %51 : vector<1x128x1xf32> to vector<128x1xf32>
    %53 = vector.extract_strided_slice %52 {offsets = [0, 0], sizes = [1, 1], strides = [1, 1]} : vector<128x1xf32> to vector<1x1xf32>
    %54 = vector.broadcast %50 : vector<128x1xf32> to vector<128x512xf32>
    %55 = arith.mulf %46, %54 : vector<128x512xf32>
    %cst_31 = arith.constant dense<0.000000e+00> : vector<512xf32>
    %56 = vector.multi_reduction <add>, %55, %cst_31 [0] : vector<128x512xf32> to vector<512xf32>
    %57 = vector.shape_cast %56 : vector<512xf32> to vector<1x512xf32>
    %58 = vector.broadcast %53 : vector<1x1xf32> to vector<1x512xf32>
    %59 = arith.addf %57, %58 : vector<1x512xf32>
    %c0_32 = arith.constant 0 : index
    %c0_33 = arith.constant 0 : index
    %60 = vector.load %arg4[%c0_32, %c0_33] : memref<1x512xf32, #tpu.memory_space<vmem>>, vector<1x512xf32>
    tpu.vector_store %arg4[%c0_32, %c0_33], %59 {strides = array<i32>} : memref<1x512xf32, #tpu.memory_space<vmem>>, vector<1x512xf32>,
    return
  }
  func.func @transform_0(%arg0: i32) -> (i32, i32) {
    %c0_i32 = arith.constant 0 : i32
    %c0_i32_0 = arith.constant 0 : i32
    return %c0_i32, %arg0 : i32, i32
  }
  func.func @transform_1(%arg0: i32) -> (i32, i32, i32) {
    %c0_i32 = arith.constant 0 : i32
    %c0_i32_0 = arith.constant 0 : i32
    %c0_i32_1 = arith.constant 0 : i32
    %c0_i32_2 = arith.constant 0 : i32
    return %c0_i32, %c0_i32_0, %c0_i32_1 : i32, i32, i32
  }
  func.func @transform_2(%arg0: i32) -> (i32, i32, i32) {
    %c0_i32 = arith.constant 0 : i32
    %c0_i32_0 = arith.constant 0 : i32
    %c0_i32_1 = arith.constant 0 : i32
    %c0_i32_2 = arith.constant 0 : i32
    return %c0_i32, %c0_i32_0, %c0_i32_1 : i32, i32, i32
  }
  func.func @transform_3(%arg0: i32) -> (i32, i32) {
    %c0_i32 = arith.constant 0 : i32
    %c0_i32_0 = arith.constant 0 : i32
    return %c0_i32, %arg0 : i32, i32
  }
}

</mosaic_0001>

<llo_original>
// kernel: pinn_forward.1
$region0: #{pinn_forward.1}
  #allocation0 [shape = 'u32[]', space=smem, size = 0x4, offset = 0x4, fixed_abs, tag = 'smem constant byte address 0x4 - core index']
  #allocation1 [shape = 'u32[144,128]{1,0:T(1,128)}', space=vmem, size = 0x12000, scoped, tag = 'internal scratch']
  %s0 = inlined_call_operand.vmem [shape: f32[2,1024], index: 0, kind: input, shape index: {}]
  %s1 = inlined_call_operand.vmem [shape: bf16[5,128,128], index: 1, kind: input, shape index: {}]
  %s2 = inlined_call_operand.vmem [shape: f32[5,128,1], index: 2, kind: input, shape index: {}]
  %s3 = inlined_call_operand.vmem [shape: f32[1,1024], index: 3, kind: output, shape index: {}]
  %s4 = sld [smem:[#allocation0]]
  $region45: #{pinn_forward.1} parent=0
    _
  %s6 = ssub.s32 1, %s4
  %s7 = scalar_select 0, %s6, %s4
  loop: start=0, step=1, limit=4
  $region2: #{pinn_forward.1} parent=0 // loop_pre_header
    _
  $region3: #{pinn_forward.1} parent=0 // loop_header
    %s9 = sphi 0, %s13
    %p10 = scmp.ge.s32.totalorder %s9, 4
    %s19 = sphi 0, %s21
    %s22 = sphi 0, %s19
    %s23 = sphi 0, %s22
    %s39 = sphi 0, %s23
    %s43 = sphi 0, %s43
    %s45 = sphi 0, %s43
    %s46 = sphi 0, %s45
    %s60 = sphi 0, %s46
    %s64 = sphi 0, %s64
    %s66 = sphi 0, %s64
    %s67 = sphi 0, %s66
    %s81 = sphi 0, %s67
    %s87 = sphi 0, %s89
    %s90 = sphi 0, %s87
    %s91 = sphi 0, %s90
    %s107 = sphi 0, %s91
  $region4: #{pinn_forward.1} parent=0 // loop_header_branch
    %12 = sbr.rel (%p10) target = $region8
  $region5: #{pinn_forward.1} parent=0 // loop_body
    %s14 = ssub.s32 %s9, 1
    %s15 = ssub.s32 %s9, 2
    %s16 = sadd.s32 %s9, 1
    %s17 = ssub.s32 %s9, %s16
    %p18 = scmp.eq.s32.totalorder %s17, 0
    %s20 = sadd.s32 %s19, 1
    %s21 = scalar_select %p18, %s19, %s20
    %p24 = pneg %p18
    %p25 = scmp.eq.s32.totalorder %s9, 1
    %p26 = por %p24, %p25
    %p27 = scmp.ne.s32.totalorder %s19, %s22
    %p28 = scmp.eq.s32.totalorder %s9, 0
    %p29 = por %p27, %p28
    %p30 = scmp.ne.s32.totalorder %s19, %s22
    %p31 = scmp.eq.s32.totalorder %s14, 1
    %p32 = por %p30, %p31
    %p33 = scmp.ne.s32.totalorder %s22, %s23
    %p34 = scmp.eq.s32.totalorder %s14, 0
    %p35 = por %p33, %p34
    %p36 = scmp.ne.s32.totalorder %s22, %s23
    %p37 = scmp.eq.s32.totalorder %s15, 1
    %p38 = por %p36, %p37
    %p40 = scmp.ne.s32.totalorder %s23, %s39
    %p41 = scmp.eq.s32.totalorder %s15, 0
    %p42 = por %p40, %p41
    %s44 = sadd.s32 %s43, 1
    %p47 = scmp.eq.s32.totalorder %s9, 1
    %p48 = scmp.ne.s32.totalorder %s43, %s45
    %p49 = scmp.eq.s32.totalorder %s9, 0
    %p50 = por %p48, %p49
    %p51 = scmp.ne.s32.totalorder %s43, %s45
    %p52 = scmp.eq.s32.totalorder %s14, 1
    %p53 = por %p51, %p52
    %p54 = scmp.ne.s32.totalorder %s45, %s46
    %p55 = scmp.eq.s32.totalorder %s14, 0
    %p56 = por %p54, %p55
    %p57 = scmp.ne.s32.totalorder %s45, %s46
    %p58 = scmp.eq.s32.totalorder %s15, 1
    %p59 = por %p57, %p58
    %p61 = scmp.ne.s32.totalorder %s46, %s60
    %p62 = scmp.eq.s32.totalorder %s15, 0
    %p63 = por %p61, %p62
    %s65 = sadd.s32 %s64, 1
    %p68 = scmp.eq.s32.totalorder %s9, 1
    %p69 = scmp.ne.s32.totalorder %s64, %s66
    %p70 = scmp.eq.s32.totalorder %s9, 0
    %p71 = por %p69, %p70
    %p72 = scmp.ne.s32.totalorder %s64, %s66
    %p73 = scmp.eq.s32.totalorder %s14, 1
    %p74 = por %p72, %p73
    %p75 = scmp.ne.s32.totalorder %s66, %s67
    %p76 = scmp.eq.s32.totalorder %s14, 0
    %p77 = por %p75, %p76
    %p78 = scmp.ne.s32.totalorder %s66, %s67
    %p79 = scmp.eq.s32.totalorder %s15, 1
    %p80 = por %p78, %p79
    %p82 = scmp.ne.s32.totalorder %s67, %s81
    %p83 = scmp.eq.s32.totalorder %s15, 0
    %p84 = por %p82, %p83
    %s85 = ssub.s32 %s9, %s16
    %p86 = scmp.eq.s32.totalorder %s85, 0
    %s88 = sadd.s32 %s87, 1
    %s89 = scalar_select %p86, %s87, %s88
    %p92 = pneg %p86
    %p93 = scmp.eq.s32.totalorder %s9, 1
    %p94 = por %p92, %p93
    %p95 = scmp.ne.s32.totalorder %s87, %s90
    %p96 = scmp.eq.s32.totalorder %s9, 0
    %p97 = por %p95, %p96
    %p98 = scmp.ne.s32.totalorder %s87, %s90
    %p99 = scmp.eq.s32.totalorder %s14, 1
    %p100 = por %p98, %p99
    %p101 = scmp.ne.s32.totalorder %s90, %s91
    %p102 = scmp.eq.s32.totalorder %s14, 0
    %p103 = por %p101, %p102
    %p104 = scmp.ne.s32.totalorder %s90, %s91
    %p105 = scmp.eq.s32.totalorder %s15, 1
    %p106 = por %p104, %p105
    %p108 = scmp.ne.s32.totalorder %s91, %s107
    %p109 = scmp.eq.s32.totalorder %s15, 0
    %p110 = por %p108, %p109
    %p111 = scmp.le.s32.totalorder 1, %s9
    %p112 = scmp.lt.s32.totalorder %s9, 3
    %p113 = pnand %p111, %p112
    %p114 = pneg %p113
    // Predicated region
    $region9: #{pinn_forward.1} parent=5 // pred_check
      _
    $region10: #{pinn_forward.1} parent=5 // pred_check_branch
      %116 = sbr.rel (%p113) target = $region12
    $region11: #{pinn_forward.1} parent=5 // pred_region
      %s117 = ssub.s32 %s9, 1
      // Predicated region
      $region13: #{pinn_forward.1} parent=11 // pred_check
        %p118 = pneg %p56
      $region14: #{pinn_forward.1} parent=11 // pred_check_branch
        %120 = sbr.rel (%p118) target = $region16
      $region15: #{pinn_forward.1} parent=11 // pred_region
        _
      $region16: #{pinn_forward.1} parent=11 // pred_fallthru
        _
      // Predicated region
      $region17: #{pinn_forward.1} parent=11 // pred_check
        %p121 = pneg %p77
      $region18: #{pinn_forward.1} parent=11 // pred_check_branch
        %123 = sbr.rel (%p121) target = $region20
      $region19: #{pinn_forward.1} parent=11 // pred_region
        _
      $region20: #{pinn_forward.1} parent=11 // pred_fallthru
        _
    $region12: #{pinn_forward.1} parent=5 // pred_fallthru
      _
    %p124 = scmp.lt.s32.totalorder %s9, 2
    // Predicated region
    $region21: #{pinn_forward.1} parent=5 // pred_check
      %p125 = pneg %p124
    $region22: #{pinn_forward.1} parent=5 // pred_check_branch
      %127 = sbr.rel (%p125) target = $region24
    $region23: #{pinn_forward.1} parent=5 // pred_region
      // Predicated region
      $region25: #{pinn_forward.1} parent=23 // pred_check
        %p128 = pneg %p29
      $region26: #{pinn_forward.1} parent=23 // pred_check_branch
        %130 = sbr.rel (%p128) target = $region28
      $region27: #{pinn_forward.1} parent=23 // pred_region
        %s131 = smul.u32 4, %s9
        %p132 = scmp.lt.s32.totalorder %s131, 7
        %s133 = scalar_select %p132, %s131, 7
        %s134 = smul.addr %s133, 2
        %s135 = scalar_lea.vmem %s0, %s134
        %s136 = smul.u32 4, %s9
      $region28: #{pinn_forward.1} parent=23 // pred_fallthru
        _
    $region24: #{pinn_forward.1} parent=5 // pred_fallthru
      _
    %p137 = scmp.le.s32.totalorder 1, %s9
    %p138 = scmp.lt.s32.totalorder %s9, 3
    %p139 = pnand %p137, %p138
    %p140 = pneg %p139
    // Predicated region
    $region29: #{pinn_forward.1} parent=5 // pred_check
      _
    $region30: #{pinn_forward.1} parent=5 // pred_check_branch
      %142 = sbr.rel (%p139) target = $region32
    $region31: #{pinn_forward.1} parent=5 // pred_region
      %s143 = ssub.s32 %s9, 1
      %s144 = smul.u32 4, %s14
      %p145 = scmp.lt.s32.totalorder %s144, 7
      %s146 = scalar_select %p145, %s144, 7
      %s147 = smul.addr %s146, 2
      %s148 = scalar_lea.vmem %s0, %s147
      %p149 = pneg %p35
      %p150 = pneg %p32
      %p151 = pneg %p56
      %p152 = pneg %p53
      %p153 = pneg %p77
      %p154 = pneg %p74
      %p155 = pneg %p103
      %p156 = pneg %p100
      %s157 = smul.u32 4, %s14
      %p158 = scmp.lt.s32.totalorder %s157, 7
      %s159 = scalar_select %p158, %s157, 7
      %s160 = scalar_lea.vmem %s3, %s159
      %s161 = smul.u32 4, %s14
      %p162 = scmp.lt.s32.totalorder %s161, 7
      %s163 = scalar_select %p162, %s161, 7
      %s164 = smul.addr %s163, 2
      %s165 = scalar_lea.vmem %s0, %s164
      %s166 = smul.u32 4, %s14
      %s167 = smul.u32 4, %s14
      %p168 = scmp.lt.s32.totalorder %s167, 7
      %s169 = scalar_select %p168, %s167, 7
      %s170 = scalar_lea.vmem %s3, %s169
      %s171 = smul.u32 4, %s14
      %v173 = vld [vmem:[%s1] sm:$0xf]
      %v174 = vld [vmem:[%s1 + $0x4] sm:$0xf]
      %v175 = vld [vmem:[%s1 + $0x8] sm:$0xf]
      %v176 = vld [vmem:[%s1 + $0xc] sm:$0xf]
      %v177 = vld [vmem:[%s1 + $0x10] sm:$0xf]
      %v178 = vld [vmem:[%s1 + $0x14] sm:$0xf]
      %v179 = vld [vmem:[%s1 + $0x18] sm:$0xf]
      %v180 = vld [vmem:[%s1 + $0x1c] sm:$0xf]
      %v181 = vld [vmem:[%s1 + $0x20] sm:$0xf]
      %v182 = vld [vmem:[%s1 + $0x24] sm:$0xf]
      %v183 = vld [vmem:[%s1 + $0x28] sm:$0xf]
      %v184 = vld [vmem:[%s1 + $0x2c] sm:$0xf]
      %v185 = vld [vmem:[%s1 + $0x30] sm:$0xf]
      %v186 = vld [vmem:[%s1 + $0x34] sm:$0xf]
      %v187 = vld [vmem:[%s1 + $0x38] sm:$0xf]
      %v188 = vld [vmem:[%s1 + $0x3c] sm:$0xf]
      %v189 = vunpack.c.l.bf16 %v173
      %v190 = vunpack.c.l.bf16 %v174
      %v191 = vunpack.c.l.bf16 %v175
      %v192 = vunpack.c.l.bf16 %v176
      %v193 = vunpack.c.l.bf16 %v177
      %v194 = vunpack.c.l.bf16 %v178
      %v195 = vunpack.c.l.bf16 %v179
      %v196 = vunpack.c.l.bf16 %v180
      %v197 = vunpack.c.l.bf16 %v181
      %v198 = vunpack.c.l.bf16 %v182
      %v199 = vunpack.c.l.bf16 %v183
      %v200 = vunpack.c.l.bf16 %v184
      %v201 = vunpack.c.l.bf16 %v185
      %v202 = vunpack.c.l.bf16 %v186
      %v203 = vunpack.c.l.bf16 %v187
      %v204 = vunpack.c.l.bf16 %v188
      %v205 = vld [vmem:[%s165] ss:$2 sm:$0xf]
      %s206 = scalar_lea.vmem %s165, 1
      %v207 = vld [vmem:[%s206] ss:$2 sm:$0xf]
      %209 = vset.pattern.permute.xlu0 0
      %210 = vperm.xlu0 %209, %v189
      %v211 = vpop.permute.xlu0 %210
      %214 = vset.pattern.permute.xlu0 0
      %215 = vperm.xlu0 %214, %v190
      %v216 = vpop.permute.xlu0 %215
      %219 = vset.pattern.permute.xlu0 0
      %220 = vperm.xlu0 %219, %v191
      %v221 = vpop.permute.xlu0 %220
      %224 = vset.pattern.permute.xlu0 0
      %225 = vperm.xlu0 %224, %v192
      %v226 = vpop.permute.xlu0 %225
      %229 = vset.pattern.permute.xlu0 0
      %230 = vperm.xlu0 %229, %v193
      %v231 = vpop.permute.xlu0 %230
      %234 = vset.pattern.permute.xlu0 0
      %235 = vperm.xlu0 %234, %v194
      %v236 = vpop.permute.xlu0 %235
      %239 = vset.pattern.permute.xlu0 0
      %240 = vperm.xlu0 %239, %v195
      %v241 = vpop.permute.xlu0 %240
      %244 = vset.pattern.permute.xlu0 0
      %245 = vperm.xlu0 %244, %v196
      %v246 = vpop.permute.xlu0 %245
      %249 = vset.pattern.permute.xlu0 0
      %250 = vperm.xlu0 %249, %v197
      %v251 = vpop.permute.xlu0 %250
      %254 = vset.pattern.permute.xlu0 0
      %255 = vperm.xlu0 %254, %v198
      %v256 = vpop.permute.xlu0 %255
      %259 = vset.pattern.permute.xlu0 0
      %260 = vperm.xlu0 %259, %v199
      %v261 = vpop.permute.xlu0 %260
      %264 = vset.pattern.permute.xlu0 0
      %265 = vperm.xlu0 %264, %v200
      %v266 = vpop.permute.xlu0 %265
      %269 = vset.pattern.permute.xlu0 0
      %270 = vperm.xlu0 %269, %v201
      %v271 = vpop.permute.xlu0 %270
      %274 = vset.pattern.permute.xlu0 0
      %275 = vperm.xlu0 %274, %v202
      %v276 = vpop.permute.xlu0 %275
      %279 = vset.pattern.permute.xlu0 0
      %280 = vperm.xlu0 %279, %v203
      %v281 = vpop.permute.xlu0 %280
      %284 = vset.pattern.permute.xlu0 0
      %285 = vperm.xlu0 %284, %v204
      %v286 = vpop.permute.xlu0 %285
      %v289 = vlaneseq
      %v290 = vshrl.u32 %v289, 7
      %v291 = vsub.s32 0, %v290
      %v292 = vrot.slane %v205, %v291
      %v293 = vlaneseq
      %v294 = vshrl.u32 %v293, 7
      %v295 = vsub.s32 1, %v294
      %v296 = vrot.slane %v205, %v295
      %v297 = vlaneseq
      %v298 = vshrl.u32 %v297, 7
      %v299 = vsub.s32 2, %v298
      %v300 = vrot.slane %v205, %v299
      %v301 = vlaneseq
      %v302 = vshrl.u32 %v301, 7
      %v303 = vsub.s32 3, %v302
      %v304 = vrot.slane %v205, %v303
      %v309 = vmul.f32 %v211, %v292
      %v310 = vmul.f32 %v211, %v296
      %v311 = vmul.f32 %v211, %v300
      %v312 = vmul.f32 %v211, %v304
      %v313 = vmul.f32 %v216, %v292
      %v314 = vmul.f32 %v216, %v296
      %v315 = vmul.f32 %v216, %v300
      %v316 = vmul.f32 %v216, %v304
      %v317 = vmul.f32 %v221, %v292
      %v318 = vmul.f32 %v221, %v296
      %v319 = vmul.f32 %v221, %v300
      %v320 = vmul.f32 %v221, %v304
      %v321 = vmul.f32 %v226, %v292
      %v322 = vmul.f32 %v226, %v296
      %v323 = vmul.f32 %v226, %v300
      %v324 = vmul.f32 %v226, %v304
      %v325 = vmul.f32 %v231, %v292
      %v326 = vmul.f32 %v231, %v296
      %v327 = vmul.f32 %v231, %v300
      %v328 = vmul.f32 %v231, %v304
      %v329 = vmul.f32 %v236, %v292
      %v330 = vmul.f32 %v236, %v296
      %v331 = vmul.f32 %v236, %v300
      %v332 = vmul.f32 %v236, %v304
      %v333 = vmul.f32 %v241, %v292
      %v334 = vmul.f32 %v241, %v296
      %v335 = vmul.f32 %v241, %v300
      %v336 = vmul.f32 %v241, %v304
      %v337 = vmul.f32 %v246, %v292
      %v338 = vmul.f32 %v246, %v296
      %v339 = vmul.f32 %v246, %v300
      %v340 = vmul.f32 %v246, %v304
      %v341 = vmul.f32 %v251, %v292
      %v342 = vmul.f32 %v251, %v296
      %v343 = vmul.f32 %v251, %v300
      %v344 = vmul.f32 %v251, %v304
      %v345 = vmul.f32 %v256, %v292
      %v346 = vmul.f32 %v256, %v296
      %v347 = vmul.f32 %v256, %v300
      %v348 = vmul.f32 %v256, %v304
      %v349 = vmul.f32 %v261, %v292
      %v350 = vmul.f32 %v261, %v296
      %v351 = vmul.f32 %v261, %v300
      %v352 = vmul.f32 %v261, %v304
      %v353 = vmul.f32 %v266, %v292
      %v354 = vmul.f32 %v266, %v296
      %v355 = vmul.f32 %v266, %v300
      %v356 = vmul.f32 %v266, %v304
      %v357 = vmul.f32 %v271, %v292
      %v358 = vmul.f32 %v271, %v296
      %v359 = vmul.f32 %v271, %v300
      %v360 = vmul.f32 %v271, %v304
      %v361 = vmul.f32 %v276, %v292
      %v362 = vmul.f32 %v276, %v296
      %v363 = vmul.f32 %v276, %v300
      %v364 = vmul.f32 %v276, %v304
      %v365 = vmul.f32 %v281, %v292
      %v366 = vmul.f32 %v281, %v296
      %v367 = vmul.f32 %v281, %v300
      %v368 = vmul.f32 %v281, %v304
      %v369 = vmul.f32 %v286, %v292
      %v370 = vmul.f32 %v286, %v296
      %v371 = vmul.f32 %v286, %v300
      %v372 = vmul.f32 %v286, %v304
      %373 = vset.pattern.permute.xlu0 1
      %374 = vperm.xlu0 %373, %v189
      %v375 = vpop.permute.xlu0 %374
      %377 = vset.pattern.permute.xlu0 1
      %378 = vperm.xlu0 %377, %v190
      %v379 = vpop.permute.xlu0 %378
      %381 = vset.pattern.permute.xlu0 1
      %382 = vperm.xlu0 %381, %v191
      %v383 = vpop.permute.xlu0 %382
      %385 = vset.pattern.permute.xlu0 1
      %386 = vperm.xlu0 %385, %v192
      %v387 = vpop.permute.xlu0 %386
      %389 = vset.pattern.permute.xlu0 1
      %390 = vperm.xlu0 %389, %v193
      %v391 = vpop.permute.xlu0 %390
      %393 = vset.pattern.permute.xlu0 1
      %394 = vperm.xlu0 %393, %v194
      %v395 = vpop.permute.xlu0 %394
      %397 = vset.pattern.permute.xlu0 1
      %398 = vperm.xlu0 %397, %v195
      %v399 = vpop.permute.xlu0 %398
      %401 = vset.pattern.permute.xlu0 1
      %402 = vperm.xlu0 %401, %v196
      %v403 = vpop.permute.xlu0 %402
      %405 = vset.pattern.permute.xlu0 1
      %406 = vperm.xlu0 %405, %v197
      %v407 = vpop.permute.xlu0 %406
      %409 = vset.pattern.permute.xlu0 1
      %410 = vperm.xlu0 %409, %v198
      %v411 = vpop.permute.xlu0 %410
      %413 = vset.pattern.permute.xlu0 1
      %414 = vperm.xlu0 %413, %v199
      %v415 = vpop.permute.xlu0 %414
      %417 = vset.pattern.permute.xlu0 1
      %418 = vperm.xlu0 %417, %v200
      %v419 = vpop.permute.xlu0 %418
      %421 = vset.pattern.permute.xlu0 1
      %422 = vperm.xlu0 %421, %v201
      %v423 = vpop.permute.xlu0 %422
      %425 = vset.pattern.permute.xlu0 1
      %426 = vperm.xlu0 %425, %v202
      %v427 = vpop.permute.xlu0 %426
      %429 = vset.pattern.permute.xlu0 1
      %430 = vperm.xlu0 %429, %v203
      %v431 = vpop.permute.xlu0 %430
      %433 = vset.pattern.permute.xlu0 1
      %434 = vperm.xlu0 %433, %v204
      %v435 = vpop.permute.xlu0 %434
      %v438 = vlaneseq
      %v439 = vshrl.u32 %v438, 7
      %v440 = vsub.s32 0, %v439
      %v441 = vrot.slane %v207, %v440
      %v442 = vlaneseq
      %v443 = vshrl.u32 %v442, 7
      %v444 = vsub.s32 1, %v443
      %v445 = vrot.slane %v207, %v444
      %v446 = vlaneseq
      %v447 = vshrl.u32 %v446, 7
      %v448 = vsub.s32 2, %v447
      %v449 = vrot.slane %v207, %v448
      %v450 = vlaneseq
      %v451 = vshrl.u32 %v450, 7
      %v452 = vsub.s32 3, %v451
      %v453 = vrot.slane %v207, %v452
      %v458 = vmul.f32 %v375, %v441
      %v459 = vmul.f32 %v375, %v445
      %v460 = vmul.f32 %v375, %v449
      %v461 = vmul.f32 %v375, %v453
      %v462 = vmul.f32 %v379, %v441
      %v463 = vmul.f32 %v379, %v445
      %v464 = vmul.f32 %v379, %v449
      %v465 = vmul.f32 %v379, %v453
      %v466 = vmul.f32 %v383, %v441
      %v467 = vmul.f32 %v383, %v445
      %v468 = vmul.f32 %v383, %v449
      %v469 = vmul.f32 %v383, %v453
      %v470 = vmul.f32 %v387, %v441
      %v471 = vmul.f32 %v387, %v445
      %v472 = vmul.f32 %v387, %v449
      %v473 = vmul.f32 %v387, %v453
      %v474 = vmul.f32 %v391, %v441
      %v475 = vmul.f32 %v391, %v445
      %v476 = vmul.f32 %v391, %v449
      %v477 = vmul.f32 %v391, %v453
      %v478 = vmul.f32 %v395, %v441
      %v479 = vmul.f32 %v395, %v445
      %v480 = vmul.f32 %v395, %v449
      %v481 = vmul.f32 %v395, %v453
      %v482 = vmul.f32 %v399, %v441
      %v483 = vmul.f32 %v399, %v445
      %v484 = vmul.f32 %v399, %v449
      %v485 = vmul.f32 %v399, %v453
      %v486 = vmul.f32 %v403, %v441
      %v487 = vmul.f32 %v403, %v445
      %v488 = vmul.f32 %v403, %v449
      %v489 = vmul.f32 %v403, %v453
      %v490 = vmul.f32 %v407, %v441
      %v491 = vmul.f32 %v407, %v445
      %v492 = vmul.f32 %v407, %v449
      %v493 = vmul.f32 %v407, %v453
      %v494 = vmul.f32 %v411, %v441
      %v495 = vmul.f32 %v411, %v445
      %v496 = vmul.f32 %v411, %v449
      %v497 = vmul.f32 %v411, %v453
      %v498 = vmul.f32 %v415, %v441
      %v499 = vmul.f32 %v415, %v445
      %v500 = vmul.f32 %v415, %v449
      %v501 = vmul.f32 %v415, %v453
      %v502 = vmul.f32 %v419, %v441
      %v503 = vmul.f32 %v419, %v445
      %v504 = vmul.f32 %v419, %v449
      %v505 = vmul.f32 %v419, %v453
      %v506 = vmul.f32 %v423, %v441
      %v507 = vmul.f32 %v423, %v445
      %v508 = vmul.f32 %v423, %v449
      %v509 = vmul.f32 %v423, %v453
      %v510 = vmul.f32 %v427, %v441
      %v511 = vmul.f32 %v427, %v445
      %v512 = vmul.f32 %v427, %v449
      %v513 = vmul.f32 %v427, %v453
      %v514 = vmul.f32 %v431, %v441
      %v515 = vmul.f32 %v431, %v445
      %v516 = vmul.f32 %v431, %v449
      %v517 = vmul.f32 %v431, %v453
      %v518 = vmul.f32 %v435, %v441
      %v519 = vmul.f32 %v435, %v445
      %v520 = vmul.f32 %v435, %v449
      %v521 = vmul.f32 %v435, %v453
      %v522 = vadd.f32 %v309, %v458
      %v523 = vadd.f32 %v310, %v459
      %v524 = vadd.f32 %v311, %v460
      %v525 = vadd.f32 %v312, %v461
      %v526 = vadd.f32 %v313, %v462
      %v527 = vadd.f32 %v314, %v463
      %v528 = vadd.f32 %v315, %v464
      %v529 = vadd.f32 %v316, %v465
      %v530 = vadd.f32 %v317, %v466
      %v531 = vadd.f32 %v318, %v467
      %v532 = vadd.f32 %v319, %v468
      %v533 = vadd.f32 %v320, %v469
      %v534 = vadd.f32 %v321, %v470
      %v535 = vadd.f32 %v322, %v471
      %v536 = vadd.f32 %v323, %v472
      %v537 = vadd.f32 %v324, %v473
      %v538 = vadd.f32 %v325, %v474
      %v539 = vadd.f32 %v326, %v475
      %v540 = vadd.f32 %v327, %v476
      %v541 = vadd.f32 %v328, %v477
      %v542 = vadd.f32 %v329, %v478
      %v543 = vadd.f32 %v330, %v479
      %v544 = vadd.f32 %v331, %v480
      %v545 = vadd.f32 %v332, %v481
      %v546 = vadd.f32 %v333, %v482
      %v547 = vadd.f32 %v334, %v483
      %v548 = vadd.f32 %v335, %v484
      %v549 = vadd.f32 %v336, %v485
      %v550 = vadd.f32 %v337, %v486
      %v551 = vadd.f32 %v338, %v487
      %v552 = vadd.f32 %v339, %v488
      %v553 = vadd.f32 %v340, %v489
      %v554 = vadd.f32 %v341, %v490
      %v555 = vadd.f32 %v342, %v491
      %v556 = vadd.f32 %v343, %v492
      %v557 = vadd.f32 %v344, %v493
      %v558 = vadd.f32 %v345, %v494
      %v559 = vadd.f32 %v346, %v495
      %v560 = vadd.f32 %v347, %v496
      %v561 = vadd.f32 %v348, %v497
      %v562 = vadd.f32 %v349, %v498
      %v563 = vadd.f32 %v350, %v499
      %v564 = vadd.f32 %v351, %v500
      %v565 = vadd.f32 %v352, %v501
      %v566 = vadd.f32 %v353, %v502
      %v567 = vadd.f32 %v354, %v503
      %v568 = vadd.f32 %v355, %v504
      %v569 = vadd.f32 %v356, %v505
      %v570 = vadd.f32 %v357, %v506
      %v571 = vadd.f32 %v358, %v507
      %v572 = vadd.f32 %v359, %v508
      %v573 = vadd.f32 %v360, %v509
      %v574 = vadd.f32 %v361, %v510
      %v575 = vadd.f32 %v362, %v511
      %v576 = vadd.f32 %v363, %v512
      %v577 = vadd.f32 %v364, %v513
      %v578 = vadd.f32 %v365, %v514
      %v579 = vadd.f32 %v366, %v515
      %v580 = vadd.f32 %v367, %v516
      %v581 = vadd.f32 %v368, %v517
      %v582 = vadd.f32 %v369, %v518
      %v583 = vadd.f32 %v370, %v519
      %v584 = vadd.f32 %v371, %v520
      %v585 = vadd.f32 %v372, %v521
      %v586 = vld [vmem:[%s2] sm:$0xff]
      %v587 = vld [vmem:[%s2 + $0x8] sm:$0xff]
      %v588 = vld [vmem:[%s2 + $0x10] sm:$0xff]
      %v589 = vld [vmem:[%s2 + $0x18] sm:$0xff]
      %v590 = vld [vmem:[%s2 + $0x20] sm:$0xff]
      %v591 = vld [vmem:[%s2 + $0x28] sm:$0xff]
      %v592 = vld [vmem:[%s2 + $0x30] sm:$0xff]
      %v593 = vld [vmem:[%s2 + $0x38] sm:$0xff]
      %v594 = vld [vmem:[%s2 + $0x40] sm:$0xff]
      %v595 = vld [vmem:[%s2 + $0x48] sm:$0xff]
      %v596 = vld [vmem:[%s2 + $0x50] sm:$0xff]
      %v597 = vld [vmem:[%s2 + $0x58] sm:$0xff]
      %v598 = vld [vmem:[%s2 + $0x60] sm:$0xff]
      %v599 = vld [vmem:[%s2 + $0x68] sm:$0xff]
      %v600 = vld [vmem:[%s2 + $0x70] sm:$0xff]
      %v601 = vld [vmem:[%s2 + $0x78] sm:$0xff]
      %603 = vset.pattern.permute.xlu0 0
      %604 = vperm.xlu0 %603, %v586
      %v605 = vpop.permute.xlu0 %604
      %608 = vset.pattern.permute.xlu0 0
      %609 = vperm.xlu0 %608, %v587
      %v610 = vpop.permute.xlu0 %609
      %613 = vset.pattern.permute.xlu0 0
      %614 = vperm.xlu0 %613, %v588
      %v615 = vpop.permute.xlu0 %614
      %618 = vset.pattern.permute.xlu0 0
      %619 = vperm.xlu0 %618, %v589
      %v620 = vpop.permute.xlu0 %619
      %623 = vset.pattern.permute.xlu0 0
      %624 = vperm.xlu0 %623, %v590
      %v625 = vpop.permute.xlu0 %624
      %628 = vset.pattern.permute.xlu0 0
      %629 = vperm.xlu0 %628, %v591
      %v630 = vpop.permute.xlu0 %629
      %633 = vset.pattern.permute.xlu0 0
      %634 = vperm.xlu0 %633, %v592
      %v635 = vpop.permute.xlu0 %634
      %638 = vset.pattern.permute.xlu0 0
      %639 = vperm.xlu0 %638, %v593
      %v640 = vpop.permute.xlu0 %639
      %643 = vset.pattern.permute.xlu0 0
      %644 = vperm.xlu0 %643, %v594
      %v645 = vpop.permute.xlu0 %644
      %648 = vset.pattern.permute.xlu0 0
      %649 = vperm.xlu0 %648, %v595
      %v650 = vpop.permute.xlu0 %649
      %653 = vset.pattern.permute.xlu0 0
      %654 = vperm.xlu0 %653, %v596
      %v655 = vpop.permute.xlu0 %654
      %658 = vset.pattern.permute.xlu0 0
      %659 = vperm.xlu0 %658, %v597
      %v660 = vpop.permute.xlu0 %659
      %663 = vset.pattern.permute.xlu0 0
      %664 = vperm.xlu0 %663, %v598
      %v665 = vpop.permute.xlu0 %664
      %668 = vset.pattern.permute.xlu0 0
      %669 = vperm.xlu0 %668, %v599
      %v670 = vpop.permute.xlu0 %669
      %673 = vset.pattern.permute.xlu0 0
      %674 = vperm.xlu0 %673, %v600
      %v675 = vpop.permute.xlu0 %674
      %678 = vset.pattern.permute.xlu0 0
      %679 = vperm.xlu0 %678, %v601
      %v680 = vpop.permute.xlu0 %679
      %v682 = vadd.f32 %v522, %v605
      %v683 = vadd.f32 %v523, %v605
      %v684 = vadd.f32 %v524, %v605
      %v685 = vadd.f32 %v525, %v605
      %v686 = vadd.f32 %v526, %v610
      %v687 = vadd.f32 %v527, %v610
      %v688 = vadd.f32 %v528, %v610
      %v689 = vadd.f32 %v529, %v610
      %v690 = vadd.f32 %v530, %v615
      %v691 = vadd.f32 %v531, %v615
      %v692 = vadd.f32 %v532, %v615
      %v693 = vadd.f32 %v533, %v615
      %v694 = vadd.f32 %v534, %v620
      %v695 = vadd.f32 %v535, %v620
      %v696 = vadd.f32 %v536, %v620
      %v697 = vadd.f32 %v537, %v620
      %v698 = vadd.f32 %v538, %v625
      %v699 = vadd.f32 %v539, %v625
      %v700 = vadd.f32 %v540, %v625
      %v701 = vadd.f32 %v541, %v625
      %v702 = vadd.f32 %v542, %v630
      %v703 = vadd.f32 %v543, %v630
      %v704 = vadd.f32 %v544, %v630
      %v705 = vadd.f32 %v545, %v630
      %v706 = vadd.f32 %v546, %v635
      %v707 = vadd.f32 %v547, %v635
      %v708 = vadd.f32 %v548, %v635
      %v709 = vadd.f32 %v549, %v635
      %v710 = vadd.f32 %v550, %v640
      %v711 = vadd.f32 %v551, %v640
      %v712 = vadd.f32 %v552, %v640
      %v713 = vadd.f32 %v553, %v640
      %v714 = vadd.f32 %v554, %v645
      %v715 = vadd.f32 %v555, %v645
      %v716 = vadd.f32 %v556, %v645
      %v717 = vadd.f32 %v557, %v645
      %v718 = vadd.f32 %v558, %v650
      %v719 = vadd.f32 %v559, %v650
      %v720 = vadd.f32 %v560, %v650
      %v721 = vadd.f32 %v561, %v650
      %v722 = vadd.f32 %v562, %v655
      %v723 = vadd.f32 %v563, %v655
      %v724 = vadd.f32 %v564, %v655
      %v725 = vadd.f32 %v565, %v655
      %v726 = vadd.f32 %v566, %v660
      %v727 = vadd.f32 %v567, %v660
      %v728 = vadd.f32 %v568, %v660
      %v729 = vadd.f32 %v569, %v660
      %v730 = vadd.f32 %v570, %v665
      %v731 = vadd.f32 %v571, %v665
      %v732 = vadd.f32 %v572, %v665
      %v733 = vadd.f32 %v573, %v665
      %v734 = vadd.f32 %v574, %v670
      %v735 = vadd.f32 %v575, %v670
      %v736 = vadd.f32 %v576, %v670
      %v737 = vadd.f32 %v577, %v670
      %v738 = vadd.f32 %v578, %v675
      %v739 = vadd.f32 %v579, %v675
      %v740 = vadd.f32 %v580, %v675
      %v741 = vadd.f32 %v581, %v675
      %v742 = vadd.f32 %v582, %v680
      %v743 = vadd.f32 %v583, %v680
      %v744 = vadd.f32 %v584, %v680
      %v745 = vadd.f32 %v585, %v680
      %v746 = vtanh.pop %v682
      %v747 = vtanh.pop %v683
      %v748 = vtanh.pop %v684
      %v749 = vtanh.pop %v685
      %v750 = vtanh.pop %v686
      %v751 = vtanh.pop %v687
      %v752 = vtanh.pop %v688
      %v753 = vtanh.pop %v689
      %v754 = vtanh.pop %v690
      %v755 = vtanh.pop %v691
      %v756 = vtanh.pop %v692
      %v757 = vtanh.pop %v693
      %v758 = vtanh.pop %v694
      %v759 = vtanh.pop %v695
      %v760 = vtanh.pop %v696
      %v761 = vtanh.pop %v697
      %v762 = vtanh.pop %v698
      %v763 = vtanh.pop %v699
      %v764 = vtanh.pop %v700
      %v765 = vtanh.pop %v701
      %v766 = vtanh.pop %v702
      %v767 = vtanh.pop %v703
      %v768 = vtanh.pop %v704
      %v769 = vtanh.pop %v705
      %v770 = vtanh.pop %v706
      %v771 = vtanh.pop %v707
      %v772 = vtanh.pop %v708
      %v773 = vtanh.pop %v709
      %v774 = vtanh.pop %v710
      %v775 = vtanh.pop %v711
      %v776 = vtanh.pop %v712
      %v777 = vtanh.pop %v713
      %v778 = vtanh.pop %v714
      %v779 = vtanh.pop %v715
      %v780 = vtanh.pop %v716
      %v781 = vtanh.pop %v717
      %v782 = vtanh.pop %v718
      %v783 = vtanh.pop %v719
      %v784 = vtanh.pop %v720
      %v785 = vtanh.pop %v721
      %v786 = vtanh.pop %v722
      %v787 = vtanh.pop %v723
      %v788 = vtanh.pop %v724
      %v789 = vtanh.pop %v725
      %v790 = vtanh.pop %v726
      %v791 = vtanh.pop %v727
      %v792 = vtanh.pop %v728
      %v793 = vtanh.pop %v729
      %v794 = vtanh.pop %v730
      %v795 = vtanh.pop %v731
      %v796 = vtanh.pop %v732
      %v797 = vtanh.pop %v733
      %v798 = vtanh.pop %v734
      %v799 = vtanh.pop %v735
      %v800 = vtanh.pop %v736
      %v801 = vtanh.pop %v737
      %v802 = vtanh.pop %v738
      %v803 = vtanh.pop %v739
      %v804 = vtanh.pop %v740
      %v805 = vtanh.pop %v741
      %v806 = vtanh.pop %v742
      %v807 = vtanh.pop %v743
      %v808 = vtanh.pop %v744
      %v809 = vtanh.pop %v745
      %s810 = scalar_lea.vmem %s1, 64
      %v811 = vld [vmem:[%s810] sm:$0xf]
      %v812 = vld [vmem:[%s810 + $0x4] sm:$0xf]
      %v813 = vld [vmem:[%s810 + $0x8] sm:$0xf]
      %v814 = vld [vmem:[%s810 + $0xc] sm:$0xf]
      %v815 = vld [vmem:[%s810 + $0x10] sm:$0xf]
      %v816 = vld [vmem:[%s810 + $0x14] sm:$0xf]
      %v817 = vld [vmem:[%s810 + $0x18] sm:$0xf]
      %v818 = vld [vmem:[%s810 + $0x1c] sm:$0xf]
      %v819 = vld [vmem:[%s810 + $0x20] sm:$0xf]
      %v820 = vld [vmem:[%s810 + $0x24] sm:$0xf]
      %v821 = vld [vmem:[%s810 + $0x28] sm:$0xf]
      %v822 = vld [vmem:[%s810 + $0x2c] sm:$0xf]
      %v823 = vld [vmem:[%s810 + $0x30] sm:$0xf]
      %v824 = vld [vmem:[%s810 + $0x34] sm:$0xf]
      %v825 = vld [vmem:[%s810 + $0x38] sm:$0xf]
      %v826 = vld [vmem:[%s810 + $0x3c] sm:$0xf]
      %v827 = vpack.c.bf16 %v750, %v746
      %v828 = vpack.c.bf16 %v751, %v747
      %v829 = vpack.c.bf16 %v752, %v748
      %v830 = vpack.c.bf16 %v753, %v749
      %v831 = vpack.c.bf16 %v758, %v754
      %v832 = vpack.c.bf16 %v759, %v755
      %v833 = vpack.c.bf16 %v760, %v756
      %v834 = vpack.c.bf16 %v761, %v757
      %v835 = vpack.c.bf16 %v766, %v762
      %v836 = vpack.c.bf16 %v767, %v763
      %v837 = vpack.c.bf16 %v768, %v764
      %v838 = vpack.c.bf16 %v769, %v765
      %v839 = vpack.c.bf16 %v774, %v770
      %v840 = vpack.c.bf16 %v775, %v771
      %v841 = vpack.c.bf16 %v776, %v772
      %v842 = vpack.c.bf16 %v777, %v773
      %v843 = vpack.c.bf16 %v782, %v778
      %v844 = vpack.c.bf16 %v783, %v779
      %v845 = vpack.c.bf16 %v784, %v780
      %v846 = vpack.c.bf16 %v785, %v781
      %v847 = vpack.c.bf16 %v790, %v786
      %v848 = vpack.c.bf16 %v791, %v787
      %v849 = vpack.c.bf16 %v792, %v788
      %v850 = vpack.c.bf16 %v793, %v789
      %v851 = vpack.c.bf16 %v798, %v794
      %v852 = vpack.c.bf16 %v799, %v795
      %v853 = vpack.c.bf16 %v800, %v796
      %v854 = vpack.c.bf16 %v801, %v797
      %v855 = vpack.c.bf16 %v806, %v802
      %v856 = vpack.c.bf16 %v807, %v803
      %v857 = vpack.c.bf16 %v808, %v804
      %v858 = vpack.c.bf16 %v809, %v805
      %s859 = scalar_lea.vmem %s2, 128
      %v860 = vld [vmem:[%s859] sm:$0xff]
      %v861 = vld [vmem:[%s859 + $0x8] sm:$0xff]
      %v862 = vld [vmem:[%s859 + $0x10] sm:$0xff]
      %v863 = vld [vmem:[%s859 + $0x18] sm:$0xff]
      %v864 = vld [vmem:[%s859 + $0x20] sm:$0xff]
      %v865 = vld [vmem:[%s859 + $0x28] sm:$0xff]
      %v866 = vld [vmem:[%s859 + $0x30] sm:$0xff]
      %v867 = vld [vmem:[%s859 + $0x38] sm:$0xff]
      %v868 = vld [vmem:[%s859 + $0x40] sm:$0xff]
      %v869 = vld [vmem:[%s859 + $0x48] sm:$0xff]
      %v870 = vld [vmem:[%s859 + $0x50] sm:$0xff]
      %v871 = vld [vmem:[%s859 + $0x58] sm:$0xff]
      %v872 = vld [vmem:[%s859 + $0x60] sm:$0xff]
      %v873 = vld [vmem:[%s859 + $0x68] sm:$0xff]
      %v874 = vld [vmem:[%s859 + $0x70] sm:$0xff]
      %v875 = vld [vmem:[%s859 + $0x78] sm:$0xff]
      %877 = vset.pattern.permute.xlu0 0
      %878 = vperm.xlu0 %877, %v860
      %v879 = vpop.permute.xlu0 %878
      %882 = vset.pattern.permute.xlu0 0
      %883 = vperm.xlu0 %882, %v861
      %v884 = vpop.permute.xlu0 %883
      %887 = vset.pattern.permute.xlu0 0
      %888 = vperm.xlu0 %887, %v862
      %v889 = vpop.permute.xlu0 %888
      %892 = vset.pattern.permute.xlu0 0
      %893 = vperm.xlu0 %892, %v863
      %v894 = vpop.permute.xlu0 %893
      %897 = vset.pattern.permute.xlu0 0
      %898 = vperm.xlu0 %897, %v864
      %v899 = vpop.permute.xlu0 %898
      %902 = vset.pattern.permute.xlu0 0
      %903 = vperm.xlu0 %902, %v865
      %v904 = vpop.permute.xlu0 %903
      %907 = vset.pattern.permute.xlu0 0
      %908 = vperm.xlu0 %907, %v866
      %v909 = vpop.permute.xlu0 %908
      %912 = vset.pattern.permute.xlu0 0
      %913 = vperm.xlu0 %912, %v867
      %v914 = vpop.permute.xlu0 %913
      %917 = vset.pattern.permute.xlu0 0
      %918 = vperm.xlu0 %917, %v868
      %v919 = vpop.permute.xlu0 %918
      %922 = vset.pattern.permute.xlu0 0
      %923 = vperm.xlu0 %922, %v869
      %v924 = vpop.permute.xlu0 %923
      %927 = vset.pattern.permute.xlu0 0
      %928 = vperm.xlu0 %927, %v870
      %v929 = vpop.permute.xlu0 %928
      %932 = vset.pattern.permute.xlu0 0
      %933 = vperm.xlu0 %932, %v871
      %v934 = vpop.permute.xlu0 %933
      %937 = vset.pattern.permute.xlu0 0
      %938 = vperm.xlu0 %937, %v872
      %v939 = vpop.permute.xlu0 %938
      %942 = vset.pattern.permute.xlu0 0
      %943 = vperm.xlu0 %942, %v873
      %v944 = vpop.permute.xlu0 %943
      %947 = vset.pattern.permute.xlu0 0
      %948 = vperm.xlu0 %947, %v874
      %v949 = vpop.permute.xlu0 %948
      %952 = vset.pattern.permute.xlu0 0
      %953 = vperm.xlu0 %952, %v875
      %v954 = vpop.permute.xlu0 %953
      %v972 = vunpack.c.l.b16 %v811
      %v973 = vunpack.c.l.b16 %v812
      %v974 = vunpack.c.l.b16 %v813
      %v975 = vunpack.c.l.b16 %v814
      %v976 = vunpack.c.l.b16 %v815
      %v977 = vunpack.c.l.b16 %v816
      %v978 = vunpack.c.l.b16 %v817
      %v979 = vunpack.c.l.b16 %v818
      %v980 = vunpack.c.l.b16 %v819
      %v981 = vunpack.c.l.b16 %v820
      %v982 = vunpack.c.l.b16 %v821
      %v983 = vunpack.c.l.b16 %v822
      %v984 = vunpack.c.l.b16 %v823
      %v985 = vunpack.c.l.b16 %v824
      %v986 = vunpack.c.l.b16 %v825
      %v987 = vunpack.c.l.b16 %v826
      %v988 = vpack.c.b16 %v973, %v972
      %v989 = vpack.c.b16 %v975, %v974
      %v990 = vpack.c.b16 %v977, %v976
      %v991 = vpack.c.b16 %v979, %v978
      %v992 = vpack.c.b16 %v981, %v980
      %v993 = vpack.c.b16 %v983, %v982
      %v994 = vpack.c.b16 %v985, %v984
      %v995 = vpack.c.b16 %v987, %v986
      %1004 = vmatprep.subr.bf16.mxu0 %v828
      %1005 = vmatpush1.bf16.msra.mxu0 %v827
      %1006 = vmatprep.subr.bf16.mxu0 %v832
      %1007 = vmatpush1.bf16.msra.mxu0 %v831
      %1008 = vmatprep.subr.bf16.mxu0 %v836
      %1009 = vmatpush1.bf16.msra.mxu0 %v835
      %1010 = vmatprep.subr.bf16.mxu0 %v840
      %1011 = vmatpush1.bf16.msra.mxu0 %v839
      %1012 = vmatprep.subr.bf16.mxu0 %v844
      %1013 = vmatpush1.bf16.msra.mxu0 %v843
      %1014 = vmatprep.subr.bf16.mxu0 %v848
      %1015 = vmatpush1.bf16.msra.mxu0 %v847
      %1016 = vmatprep.subr.bf16.mxu0 %v852
      %1017 = vmatpush1.bf16.msra.mxu0 %v851
      %1018 = vmatprep.subr.bf16.mxu0 %v856
      %1019 = vmatpush1.bf16.msra.mxu0 %v855
      %1020 = vmatprep.subr.bf16.mxu0 0
      %1021 = vmatpush1.bf16.msra.mxu0 0
      %1022 = vmatprep.subr.bf16.mxu0 0
      %1023 = vmatpush1.bf16.msra.mxu0 0
      %1024 = vmatprep.subr.bf16.mxu0 0
      %1025 = vmatpush1.bf16.msra.mxu0 0
      %1026 = vmatprep.subr.bf16.mxu0 0
      %1027 = vmatpush1.bf16.msra.mxu0 0
      %1028 = vmatprep.subr.bf16.mxu0 0
      %1029 = vmatpush1.bf16.msra.mxu0 0
      %1030 = vmatprep.subr.bf16.mxu0 0
      %1031 = vmatpush1.bf16.msra.mxu0 0
      %1032 = vmatprep.subr.bf16.mxu0 0
      %1033 = vmatpush1.bf16.msra.mxu0 0
      %1034 = vmatprep.subr.bf16.mxu0 0
      %1035 = vmatpush1.bf16.msra.mxu0 0
      %1036 = vmatprep.mubr.bf16.mxu0 0
      %1037 = vmatmul.mubr.bf16.gmra.mrb[0].mxu0 %v988
      %v1038 = vpop.f32.mrb[0].mxu0
      %v1039 = vadd.f32 %v879, %v1038
      %v1040 = vpop.f32.mrb[0].mxu0
      %v1041 = vadd.f32 %v879, %v1040
      %v1042 = vpop.f32.mrb[0].mxu0
      %v1043 = vadd.f32 %v884, %v1042
      %v1044 = vpop.f32.mrb[0].mxu0
      %v1045 = vadd.f32 %v884, %v1044
      %1046 = vmatprep.mubr.bf16.mxu0 0
      %1047 = vmatmul.mubr.bf16.gmra.mrb[0].mxu0 %v989
      %v1048 = vpop.f32.mrb[0].mxu0
      %v1049 = vadd.f32 %v889, %v1048
      %v1050 = vpop.f32.mrb[0].mxu0
      %v1051 = vadd.f32 %v889, %v1050
      %v1052 = vpop.f32.mrb[0].mxu0
      %v1053 = vadd.f32 %v894, %v1052
      %v1054 = vpop.f32.mrb[0].mxu0
      %v1055 = vadd.f32 %v894, %v1054
      %1056 = vmatprep.mubr.bf16.mxu0 0
      %1057 = vmatmul.mubr.bf16.gmra.mrb[0].mxu0 %v990
      %v1058 = vpop.f32.mrb[0].mxu0
      %v1059 = vadd.f32 %v899, %v1058
      %v1060 = vpop.f32.mrb[0].mxu0
      %v1061 = vadd.f32 %v899, %v1060
      %v1062 = vpop.f32.mrb[0].mxu0
      %v1063 = vadd.f32 %v904, %v1062
      %v1064 = vpop.f32.mrb[0].mxu0
      %v1065 = vadd.f32 %v904, %v1064
      %1066 = vmatprep.mubr.bf16.mxu0 0
      %1067 = vmatmul.mubr.bf16.gmra.mrb[0].mxu0 %v991
      %v1068 = vpop.f32.mrb[0].mxu0
      %v1069 = vadd.f32 %v909, %v1068
      %v1070 = vpop.f32.mrb[0].mxu0
      %v1071 = vadd.f32 %v909, %v1070
      %v1072 = vpop.f32.mrb[0].mxu0
      %v1073 = vadd.f32 %v914, %v1072
      %v1074 = vpop.f32.mrb[0].mxu0
      %v1075 = vadd.f32 %v914, %v1074
      %1076 = vmatprep.mubr.bf16.mxu0 0
      %1077 = vmatmul.mubr.bf16.gmra.mrb[0].mxu0 %v992
      %v1078 = vpop.f32.mrb[0].mxu0
      %v1079 = vadd.f32 %v919, %v1078
      %v1080 = vpop.f32.mrb[0].mxu0
      %v1081 = vadd.f32 %v919, %v1080
      %v1082 = vpop.f32.mrb[0].mxu0
      %v1083 = vadd.f32 %v924, %v1082
      %v1084 = vpop.f32.mrb[0].mxu0
      %v1085 = vadd.f32 %v924, %v1084
      %1086 = vmatprep.mubr.bf16.mxu0 0
      %1087 = vmatmul.mubr.bf16.gmra.mrb[0].mxu0 %v993
      %v1088 = vpop.f32.mrb[0].mxu0
      %v1089 = vadd.f32 %v929, %v1088
      %v1090 = vpop.f32.mrb[0].mxu0
      %v1091 = vadd.f32 %v929, %v1090
      %v1092 = vpop.f32.mrb[0].mxu0
      %v1093 = vadd.f32 %v934, %v1092
      %v1094 = vpop.f32.mrb[0].mxu0
      %v1095 = vadd.f32 %v934, %v1094
      %1096 = vmatprep.mubr.bf16.mxu0 0
      %1097 = vmatmul.mubr.bf16.gmra.mrb[0].mxu0 %v994
      %v1098 = vpop.f32.mrb[0].mxu0
      %v1099 = vadd.f32 %v939, %v1098
      %v1100 = vpop.f32.mrb[0].mxu0
      %v1101 = vadd.f32 %v939, %v1100
      %v1102 = vpop.f32.mrb[0].mxu0
      %v1103 = vadd.f32 %v944, %v1102
      %v1104 = vpop.f32.mrb[0].mxu0
      %v1105 = vadd.f32 %v944, %v1104
      %1106 = vmatprep.mubr.bf16.mxu0 0
      %1107 = vmatmul.mubr.bf16.gmra.mrb[0].mxu0 %v995
      %v1108 = vpop.f32.mrb[0].mxu0
      %v1109 = vadd.f32 %v949, %v1108
      %v1110 = vpop.f32.mrb[0].mxu0
      %v1111 = vadd.f32 %v949, %v1110
      %v1112 = vpop.f32.mrb[0].mxu0
      %v1113 = vadd.f32 %v954, %v1112
      %v1114 = vpop.f32.mrb[0].mxu0
      %v1115 = vadd.f32 %v954, %v1114
      %1116 = vdwg.mxu0
      %1117 = vmatprep.subr.bf16.mxu0 %v830
      %1118 = vmatpush1.bf16.msra.mxu0 %v829
      %1119 = vmatprep.subr.bf16.mxu0 %v834
      %1120 = vmatpush1.bf16.msra.mxu0 %v833
      %1121 = vmatprep.subr.bf16.mxu0 %v838
      %1122 = vmatpush1.bf16.msra.mxu0 %v837
      %1123 = vmatprep.subr.bf16.mxu0 %v842
      %1124 = vmatpush1.bf16.msra.mxu0 %v841
      %1125 = vmatprep.subr.bf16.mxu0 %v846
      %1126 = vmatpush1.bf16.msra.mxu0 %v845
      %1127 = vmatprep.subr.bf16.mxu0 %v850
      %1128 = vmatpush1.bf16.msra.mxu0 %v849
      %1129 = vmatprep.subr.bf16.mxu0 %v854
      %1130 = vmatpush1.bf16.msra.mxu0 %v853
      %1131 = vmatprep.subr.bf16.mxu0 %v858
      %1132 = vmatpush1.bf16.msra.mxu0 %v857
      %1133 = vmatprep.subr.bf16.mxu0 0
      %1134 = vmatpush1.bf16.msra.mxu0 0
      %1135 = vmatprep.subr.bf16.mxu0 0
      %1136 = vmatpush1.bf16.msra.mxu0 0
      %1137 = vmatprep.subr.bf16.mxu0 0
      %1138 = vmatpush1.bf16.msra.mxu0 0
      %1139 = vmatprep.subr.bf16.mxu0 0
      %1140 = vmatpush1.bf16.msra.mxu0 0
      %1141 = vmatprep.subr.bf16.mxu0 0
      %1142 = vmatpush1.bf16.msra.mxu0 0
      %1143 = vmatprep.subr.bf16.mxu0 0
      %1144 = vmatpush1.bf16.msra.mxu0 0
      %1145 = vmatprep.subr.bf16.mxu0 0
      %1146 = vmatpush1.bf16.msra.mxu0 0
      %1147 = vmatprep.subr.bf16.mxu0 0
      %1148 = vmatpush1.bf16.msra.mxu0 0
      %1149 = vmatprep.mubr.bf16.mxu0 0
      %1150 = vmatmul.mubr.bf16.gmra.mrb[0].mxu0 %v988
      %v1151 = vpop.f32.mrb[0].mxu0
      %v1152 = vadd.f32 %v879, %v1151
      %v1153 = vpop.f32.mrb[0].mxu0
      %v1154 = vadd.f32 %v879, %v1153
      %v1155 = vpop.f32.mrb[0].mxu0
      %v1156 = vadd.f32 %v884, %v1155
      %v1157 = vpop.f32.mrb[0].mxu0
      %v1158 = vadd.f32 %v884, %v1157
      %1159 = vmatprep.mubr.bf16.mxu0 0
      %1160 = vmatmul.mubr.bf16.gmra.mrb[0].mxu0 %v989
      %v1161 = vpop.f32.mrb[0].mxu0
      %v1162 = vadd.f32 %v889, %v1161
      %v1163 = vpop.f32.mrb[0].mxu0
      %v1164 = vadd.f32 %v889, %v1163
      %v1165 = vpop.f32.mrb[0].mxu0
      %v1166 = vadd.f32 %v894, %v1165
      %v1167 = vpop.f32.mrb[0].mxu0
      %v1168 = vadd.f32 %v894, %v1167
      %1169 = vmatprep.mubr.bf16.mxu0 0
      %1170 = vmatmul.mubr.bf16.gmra.mrb[0].mxu0 %v990
      %v1171 = vpop.f32.mrb[0].mxu0
      %v1172 = vadd.f32 %v899, %v1171
      %v1173 = vpop.f32.mrb[0].mxu0
      %v1174 = vadd.f32 %v899, %v1173
      %v1175 = vpop.f32.mrb[0].mxu0
      %v1176 = vadd.f32 %v904, %v1175
      %v1177 = vpop.f32.mrb[0].mxu0
      %v1178 = vadd.f32 %v904, %v1177
      %1179 = vmatprep.mubr.bf16.mxu0 0
      %1180 = vmatmul.mubr.bf16.gmra.mrb[0].mxu0 %v991
      %v1181 = vpop.f32.mrb[0].mxu0
      %v1182 = vadd.f32 %v909, %v1181
      %v1183 = vpop.f32.mrb[0].mxu0
      %v1184 = vadd.f32 %v909, %v1183
      %v1185 = vpop.f32.mrb[0].mxu0
      %v1186 = vadd.f32 %v914, %v1185
      %v1187 = vpop.f32.mrb[0].mxu0
      %v1188 = vadd.f32 %v914, %v1187
      %1189 = vmatprep.mubr.bf16.mxu0 0
      %1190 = vmatmul.mubr.bf16.gmra.mrb[0].mxu0 %v992
      %v1191 = vpop.f32.mrb[0].mxu0
      %v1192 = vadd.f32 %v919, %v1191
      %v1193 = vpop.f32.mrb[0].mxu0
      %v1194 = vadd.f32 %v919, %v1193
      %v1195 = vpop.f32.mrb[0].mxu0
      %v1196 = vadd.f32 %v924, %v1195
      %v1197 = vpop.f32.mrb[0].mxu0
      %v1198 = vadd.f32 %v924, %v1197
      %1199 = vmatprep.mubr.bf16.mxu0 0
      %1200 = vmatmul.mubr.bf16.gmra.mrb[0].mxu0 %v993
      %v1201 = vpop.f32.mrb[0].mxu0
      %v1202 = vadd.f32 %v929, %v1201
      %v1203 = vpop.f32.mrb[0].mxu0
      %v1204 = vadd.f32 %v929, %v1203
      %v1205 = vpop.f32.mrb[0].mxu0
      %v1206 = vadd.f32 %v934, %v1205
      %v1207 = vpop.f32.mrb[0].mxu0
      %v1208 = vadd.f32 %v934, %v1207
      %1209 = vmatprep.mubr.bf16.mxu0 0
      %1210 = vmatmul.mubr.bf16.gmra.mrb[0].mxu0 %v994
      %v1211 = vpop.f32.mrb[0].mxu0
      %v1212 = vadd.f32 %v939, %v1211
      %v1213 = vpop.f32.mrb[0].mxu0
      %v1214 = vadd.f32 %v939, %v1213
      %v1215 = vpop.f32.mrb[0].mxu0
      %v1216 = vadd.f32 %v944, %v1215
      %v1217 = vpop.f32.mrb[0].mxu0
      %v1218 = vadd.f32 %v944, %v1217
      %1219 = vmatprep.mubr.bf16.mxu0 0
      %1220 = vmatmul.mubr.bf16.gmra.mrb[0].mxu0 %v995
      %v1221 = vpop.f32.mrb[0].mxu0
      %v1222 = vadd.f32 %v949, %v1221
      %v1223 = vpop.f32.mrb[0].mxu0
      %v1224 = vadd.f32 %v949, %v1223
      %v1225 = vpop.f32.mrb[0].mxu0
      %v1226 = vadd.f32 %v954, %v1225
      %v1227 = vpop.f32.mrb[0].mxu0
      %v1228 = vadd.f32 %v954, %v1227
      %1229 = vdwg.mxu0
      %v1230 = vtanh.pop %v1039
      %v1231 = vtanh.pop %v1041
      %v1232 = vtanh.pop %v1152
      %v1233 = vtanh.pop %v1154
      %v1234 = vtanh.pop %v1043
      %v1235 = vtanh.pop %v1045
      %v1236 = vtanh.pop %v1156
      %v1237 = vtanh.pop %v1158
      %v1238 = vtanh.pop %v1049
      %v1239 = vtanh.pop %v1051
      %v1240 = vtanh.pop %v1162
      %v1241 = vtanh.pop %v1164
      %v1242 = vtanh.pop %v1053
      %v1243 = vtanh.pop %v1055
      %v1244 = vtanh.pop %v1166
      %v1245 = vtanh.pop %v1168
      %v1246 = vtanh.pop %v1059
      %v1247 = vtanh.pop %v1061
      %v1248 = vtanh.pop %v1172
      %v1249 = vtanh.pop %v1174
      %v1250 = vtanh.pop %v1063
      %v1251 = vtanh.pop %v1065
      %v1252 = vtanh.pop %v1176
      %v1253 = vtanh.pop %v1178
      %v1254 = vtanh.pop %v1069
      %v1255 = vtanh.pop %v1071
      %v1256 = vtanh.pop %v1182
      %v1257 = vtanh.pop %v1184
      %v1258 = vtanh.pop %v1073
      %v1259 = vtanh.pop %v1075
      %v1260 = vtanh.pop %v1186
      %v1261 = vtanh.pop %v1188
      %v1262 = vtanh.pop %v1079
      %v1263 = vtanh.pop %v1081
      %v1264 = vtanh.pop %v1192
      %v1265 = vtanh.pop %v1194
      %v1266 = vtanh.pop %v1083
      %v1267 = vtanh.pop %v1085
      %v1268 = vtanh.pop %v1196
      %v1269 = vtanh.pop %v1198
      %v1270 = vtanh.pop %v1089
      %v1271 = vtanh.pop %v1091
      %v1272 = vtanh.pop %v1202
      %v1273 = vtanh.pop %v1204
      %v1274 = vtanh.pop %v1093
      %v1275 = vtanh.pop %v1095
      %v1276 = vtanh.pop %v1206
      %v1277 = vtanh.pop %v1208
      %v1278 = vtanh.pop %v1099
      %v1279 = vtanh.pop %v1101
      %v1280 = vtanh.pop %v1212
      %v1281 = vtanh.pop %v1214
      %v1282 = vtanh.pop %v1103
      %v1283 = vtanh.pop %v1105
      %v1284 = vtanh.pop %v1216
      %v1285 = vtanh.pop %v1218
      %v1286 = vtanh.pop %v1109
      %v1287 = vtanh.pop %v1111
      %v1288 = vtanh.pop %v1222
      %v1289 = vtanh.pop %v1224
      %v1290 = vtanh.pop %v1113
      %v1291 = vtanh.pop %v1115
      %v1292 = vtanh.pop %v1226
      %v1293 = vtanh.pop %v1228
      %s1294 = scalar_lea.vmem %s1, 128
      %v1295 = vld [vmem:[%s1294] sm:$0xf]
      %v1296 = vld [vmem:[%s1294 + $0x4] sm:$0xf]
      %v1297 = vld [vmem:[%s1294 + $0x8] sm:$0xf]
      %v1298 = vld [vmem:[%s1294 + $0xc] sm:$0xf]
      %v1299 = vld [vmem:[%s1294 + $0x10] sm:$0xf]
      %v1300 = vld [vmem:[%s1294 + $0x14] sm:$0xf]
      %v1301 = vld [vmem:[%s1294 + $0x18] sm:$0xf]
      %v1302 = vld [vmem:[%s1294 + $0x1c] sm:$0xf]
      %v1303 = vld [vmem:[%s1294 + $0x20] sm:$0xf]
      %v1304 = vld [vmem:[%s1294 + $0x24] sm:$0xf]
      %v1305 = vld [vmem:[%s1294 + $0x28] sm:$0xf]
      %v1306 = vld [vmem:[%s1294 + $0x2c] sm:$0xf]
      %v1307 = vld [vmem:[%s1294 + $0x30] sm:$0xf]
      %v1308 = vld [vmem:[%s1294 + $0x34] sm:$0xf]
      %v1309 = vld [vmem:[%s1294 + $0x38] sm:$0xf]
      %v1310 = vld [vmem:[%s1294 + $0x3c] sm:$0xf]
      %v1311 = vpack.c.bf16 %v1234, %v1230
      %v1312 = vpack.c.bf16 %v1235, %v1231
      %v1313 = vpack.c.bf16 %v1236, %v1232
      %v1314 = vpack.c.bf16 %v1237, %v1233
      %v1315 = vpack.c.bf16 %v1242, %v1238
      %v1316 = vpack.c.bf16 %v1243, %v1239
      %v1317 = vpack.c.bf16 %v1244, %v1240
      %v1318 = vpack.c.bf16 %v1245, %v1241
      %v1319 = vpack.c.bf16 %v1250, %v1246
      %v1320 = vpack.c.bf16 %v1251, %v1247
      %v1321 = vpack.c.bf16 %v1252, %v1248
      %v1322 = vpack.c.bf16 %v1253, %v1249
      %v1323 = vpack.c.bf16 %v1258, %v1254
      %v1324 = vpack.c.bf16 %v1259, %v1255
      %v1325 = vpack.c.bf16 %v1260, %v1256
      %v1326 = vpack.c.bf16 %v1261, %v1257
      %v1327 = vpack.c.bf16 %v1266, %v1262
      %v1328 = vpack.c.bf16 %v1267, %v1263
      %v1329 = vpack.c.bf16 %v1268, %v1264
      %v1330 = vpack.c.bf16 %v1269, %v1265
      %v1331 = vpack.c.bf16 %v1274, %v1270
      %v1332 = vpack.c.bf16 %v1275, %v1271
      %v1333 = vpack.c.bf16 %v1276, %v1272
      %v1334 = vpack.c.bf16 %v1277, %v1273
      %v1335 = vpack.c.bf16 %v1282, %v1278
      %v1336 = vpack.c.bf16 %v1283, %v1279
      %v1337 = vpack.c.bf16 %v1284, %v1280
      %v1338 = vpack.c.bf16 %v1285, %v1281
      %v1339 = vpack.c.bf16 %v1290, %v1286
      %v1340 = vpack.c.bf16 %v1291, %v1287
      %v1341 = vpack.c.bf16 %v1292, %v1288
      %v1342 = vpack.c.bf16 %v1293, %v1289
      %s1343 = scalar_lea.vmem %s2, 256
      %v1344 = vld [vmem:[%s1343] sm:$0xff]
      %v1345 = vld [vmem:[%s1343 + $0x8] sm:$0xff]
      %v1346 = vld [vmem:[%s1343 + $0x10] sm:$0xff]
      %v1347 = vld [vmem:[%s1343 + $0x18] sm:$0xff]
      %v1348 = vld [vmem:[%s1343 + $0x20] sm:$0xff]
      %v1349 = vld [vmem:[%s1343 + $0x28] sm:$0xff]
      %v1350 = vld [vmem:[%s1343 + $0x30] sm:$0xff]
      %v1351 = vld [vmem:[%s1343 + $0x38] sm:$0xff]
      %v1352 = vld [vmem:[%s1343 + $0x40] sm:$0xff]
      %v1353 = vld [vmem:[%s1343 + $0x48] sm:$0xff]
      %v1354 = vld [vmem:[%s1343 + $0x50] sm:$0xff]
      %v1355 = vld [vmem:[%s1343 + $0x58] sm:$0xff]
      %v1356 = vld [vmem:[%s1343 + $0x60] sm:$0xff]
      %v1357 = vld [vmem:[%s1343 + $0x68] sm:$0xff]
      %v1358 = vld [vmem:[%s1343 + $0x70] sm:$0xff]
      %v1359 = vld [vmem:[%s1343 + $0x78] sm:$0xff]
      %1361 = vset.pattern.permute.xlu0 0
      %1362 = vperm.xlu0 %1361, %v1344
      %v1363 = vpop.permute.xlu0 %1362
      %1366 = vset.pattern.permute.xlu0 0
      %1367 = vperm.xlu0 %1366, %v1345
      %v1368 = vpop.permute.xlu0 %1367
      %1371 = vset.pattern.permute.xlu0 0
      %1372 = vperm.xlu0 %1371, %v1346
      %v1373 = vpop.permute.xlu0 %1372
      %1376 = vset.pattern.permute.xlu0 0
      %1377 = vperm.xlu0 %1376, %v1347
      %v1378 = vpop.permute.xlu0 %1377
      %1381 = vset.pattern.permute.xlu0 0
      %1382 = vperm.xlu0 %1381, %v1348
      %v1383 = vpop.permute.xlu0 %1382
      %1386 = vset.pattern.permute.xlu0 0
      %1387 = vperm.xlu0 %1386, %v1349
      %v1388 = vpop.permute.xlu0 %1387
      %1391 = vset.pattern.permute.xlu0 0
      %1392 = vperm.xlu0 %1391, %v1350
      %v1393 = vpop.permute.xlu0 %1392
      %1396 = vset.pattern.permute.xlu0 0
      %1397 = vperm.xlu0 %1396, %v1351
      %v1398 = vpop.permute.xlu0 %1397
      %1401 = vset.pattern.permute.xlu0 0
      %1402 = vperm.xlu0 %1401, %v1352
      %v1403 = vpop.permute.xlu0 %1402
      %1406 = vset.pattern.permute.xlu0 0
      %1407 = vperm.xlu0 %1406, %v1353
      %v1408 = vpop.permute.xlu0 %1407
      %1411 = vset.pattern.permute.xlu0 0
      %1412 = vperm.xlu0 %1411, %v1354
      %v1413 = vpop.permute.xlu0 %1412
      %1416 = vset.pattern.permute.xlu0 0
      %1417 = vperm.xlu0 %1416, %v1355
      %v1418 = vpop.permute.xlu0 %1417
      %1421 = vset.pattern.permute.xlu0 0
      %1422 = vperm.xlu0 %1421, %v1356
      %v1423 = vpop.permute.xlu0 %1422
      %1426 = vset.pattern.permute.xlu0 0
      %1427 = vperm.xlu0 %1426, %v1357
      %v1428 = vpop.permute.xlu0 %1427
      %1431 = vset.pattern.permute.xlu0 0
      %1432 = vperm.xlu0 %1431, %v1358
      %v1433 = vpop.permute.xlu0 %1432
      %1436 = vset.pattern.permute.xlu0 0
      %1437 = vperm.xlu0 %1436, %v1359
      %v1438 = vpop.permute.xlu0 %1437
      %v1456 = vunpack.c.l.b16 %v1295
      %v1457 = vunpack.c.l.b16 %v1296
      %v1458 = vunpack.c.l.b16 %v1297
      %v1459 = vunpack.c.l.b16 %v1298
      %v1460 = vunpack.c.l.b16 %v1299
      %v1461 = vunpack.c.l.b16 %v1300
      %v1462 = vunpack.c.l.b16 %v1301
      %v1463 = vunpack.c.l.b16 %v1302
      %v1464 = vunpack.c.l.b16 %v1303
      %v1465 = vunpack.c.l.b16 %v1304
      %v1466 = vunpack.c.l.b16 %v1305
      %v1467 = vunpack.c.l.b16 %v1306
      %v1468 = vunpack.c.l.b16 %v1307
      %v1469 = vunpack.c.l.b16 %v1308
      %v1470 = vunpack.c.l.b16 %v1309
      %v1471 = vunpack.c.l.b16 %v1310
      %v1472 = vpack.c.b16 %v1457, %v1456
      %v1473 = vpack.c.b16 %v1459, %v1458
      %v1474 = vpack.c.b16 %v1461, %v1460
      %v1475 = vpack.c.b16 %v1463, %v1462
      %v1476 = vpack.c.b16 %v1465, %v1464
      %v1477 = vpack.c.b16 %v1467, %v1466
      %v1478 = vpack.c.b16 %v1469, %v1468
      %v1479 = vpack.c.b16 %v1471, %v1470
      %1488 = vmatprep.subr.bf16.mxu0 %v1312
      %1489 = vmatpush1.bf16.msra.mxu0 %v1311
      %1490 = vmatprep.subr.bf16.mxu0 %v1316
      %1491 = vmatpush1.bf16.msra.mxu0 %v1315
      %1492 = vmatprep.subr.bf16.mxu0 %v1320
      %1493 = vmatpush1.bf16.msra.mxu0 %v1319
      %1494 = vmatprep.subr.bf16.mxu0 %v1324
      %1495 = vmatpush1.bf16.msra.mxu0 %v1323
      %1496 = vmatprep.subr.bf16.mxu0 %v1328
      %1497 = vmatpush1.bf16.msra.mxu0 %v1327
      %1498 = vmatprep.subr.bf16.mxu0 %v1332
      %1499 = vmatpush1.bf16.msra.mxu0 %v1331
      %1500 = vmatprep.subr.bf16.mxu0 %v1336
      %1501 = vmatpush1.bf16.msra.mxu0 %v1335
      %1502 = vmatprep.subr.bf16.mxu0 %v1340
      %1503 = vmatpush1.bf16.msra.mxu0 %v1339
      %1504 = vmatprep.subr.bf16.mxu0 0
      %1505 = vmatpush1.bf16.msra.mxu0 0
      %1506 = vmatprep.subr.bf16.mxu0 0
      %1507 = vmatpush1.bf16.msra.mxu0 0
      %1508 = vmatprep.subr.bf16.mxu0 0
      %1509 = vmatpush1.bf16.msra.mxu0 0
      %1510 = vmatprep.subr.bf16.mxu0 0
      %1511 = vmatpush1.bf16.msra.mxu0 0
      %1512 = vmatprep.subr.bf16.mxu0 0
      %1513 = vmatpush1.bf16.msra.mxu0 0
      %1514 = vmatprep.subr.bf16.mxu0 0
      %1515 = vmatpush1.bf16.msra.mxu0 0
      %1516 = vmatprep.subr.bf16.mxu0 0
      %1517 = vmatpush1.bf16.msra.mxu0 0
      %1518 = vmatprep.subr.bf16.mxu0 0
      %1519 = vmatpush1.bf16.msra.mxu0 0
      %1520 = vmatprep.mubr.bf16.mxu0 0
      %1521 = vmatmul.mubr.bf16.gmra.mrb[0].mxu0 %v1472
      %v1522 = vpop.f32.mrb[0].mxu0
      %v1523 = vadd.f32 %v1363, %v1522
      %v1524 = vpop.f32.mrb[0].mxu0
      %v1525 = vadd.f32 %v1363, %v1524
      %v1526 = vpop.f32.mrb[0].mxu0
      %v1527 = vadd.f32 %v1368, %v1526
      %v1528 = vpop.f32.mrb[0].mxu0
      %v1529 = vadd.f32 %v1368, %v1528
      %1530 = vmatprep.mubr.bf16.mxu0 0
      %1531 = vmatmul.mubr.bf16.gmra.mrb[0].mxu0 %v1473
      %v1532 = vpop.f32.mrb[0].mxu0
      %v1533 = vadd.f32 %v1373, %v1532
      %v1534 = vpop.f32.mrb[0].mxu0
      %v1535 = vadd.f32 %v1373, %v1534
      %v1536 = vpop.f32.mrb[0].mxu0
      %v1537 = vadd.f32 %v1378, %v1536
      %v1538 = vpop.f32.mrb[0].mxu0
      %v1539 = vadd.f32 %v1378, %v1538
      %1540 = vmatprep.mubr.bf16.mxu0 0
      %1541 = vmatmul.mubr.bf16.gmra.mrb[0].mxu0 %v1474
      %v1542 = vpop.f32.mrb[0].mxu0
      %v1543 = vadd.f32 %v1383, %v1542
      %v1544 = vpop.f32.mrb[0].mxu0
      %v1545 = vadd.f32 %v1383, %v1544
      %v1546 = vpop.f32.mrb[0].mxu0
      %v1547 = vadd.f32 %v1388, %v1546
      %v1548 = vpop.f32.mrb[0].mxu0
      %v1549 = vadd.f32 %v1388, %v1548
      %1550 = vmatprep.mubr.bf16.mxu0 0
      %1551 = vmatmul.mubr.bf16.gmra.mrb[0].mxu0 %v1475
      %v1552 = vpop.f32.mrb[0].mxu0
      %v1553 = vadd.f32 %v1393, %v1552
      %v1554 = vpop.f32.mrb[0].mxu0
      %v1555 = vadd.f32 %v1393, %v1554
      %v1556 = vpop.f32.mrb[0].mxu0
      %v1557 = vadd.f32 %v1398, %v1556
      %v1558 = vpop.f32.mrb[0].mxu0
      %v1559 = vadd.f32 %v1398, %v1558
      %1560 = vmatprep.mubr.bf16.mxu0 0
      %1561 = vmatmul.mubr.bf16.gmra.mrb[0].mxu0 %v1476
      %v1562 = vpop.f32.mrb[0].mxu0
      %v1563 = vadd.f32 %v1403, %v1562
      %v1564 = vpop.f32.mrb[0].mxu0
      %v1565 = vadd.f32 %v1403, %v1564
      %v1566 = vpop.f32.mrb[0].mxu0
      %v1567 = vadd.f32 %v1408, %v1566
      %v1568 = vpop.f32.mrb[0].mxu0
      %v1569 = vadd.f32 %v1408, %v1568
      %1570 = vmatprep.mubr.bf16.mxu0 0
      %1571 = vmatmul.mubr.bf16.gmra.mrb[0].mxu0 %v1477
      %v1572 = vpop.f32.mrb[0].mxu0
      %v1573 = vadd.f32 %v1413, %v1572
      %v1574 = vpop.f32.mrb[0].mxu0
      %v1575 = vadd.f32 %v1413, %v1574
      %v1576 = vpop.f32.mrb[0].mxu0
      %v1577 = vadd.f32 %v1418, %v1576
      %v1578 = vpop.f32.mrb[0].mxu0
      %v1579 = vadd.f32 %v1418, %v1578
      %1580 = vmatprep.mubr.bf16.mxu0 0
      %1581 = vmatmul.mubr.bf16.gmra.mrb[0].mxu0 %v1478
      %v1582 = vpop.f32.mrb[0].mxu0
      %v1583 = vadd.f32 %v1423, %v1582
      %v1584 = vpop.f32.mrb[0].mxu0
      %v1585 = vadd.f32 %v1423, %v1584
      %v1586 = vpop.f32.mrb[0].mxu0
      %v1587 = vadd.f32 %v1428, %v1586
      %v1588 = vpop.f32.mrb[0].mxu0
      %v1589 = vadd.f32 %v1428, %v1588
      %1590 = vmatprep.mubr.bf16.mxu0 0
      %1591 = vmatmul.mubr.bf16.gmra.mrb[0].mxu0 %v1479
      %v1592 = vpop.f32.mrb[0].mxu0
      %v1593 = vadd.f32 %v1433, %v1592
      %v1594 = vpop.f32.mrb[0].mxu0
      %v1595 = vadd.f32 %v1433, %v1594
      %v1596 = vpop.f32.mrb[0].mxu0
      %v1597 = vadd.f32 %v1438, %v1596
      %v1598 = vpop.f32.mrb[0].mxu0
      %v1599 = vadd.f32 %v1438, %v1598
      %1600 = vdwg.mxu0
      %1601 = vmatprep.subr.bf16.mxu0 %v1314
      %1602 = vmatpush1.bf16.msra.mxu0 %v1313
      %1603 = vmatprep.subr.bf16.mxu0 %v1318
      %1604 = vmatpush1.bf16.msra.mxu0 %v1317
      %1605 = vmatprep.subr.bf16.mxu0 %v1322
      %1606 = vmatpush1.bf16.msra.mxu0 %v1321
      %1607 = vmatprep.subr.bf16.mxu0 %v1326
      %1608 = vmatpush1.bf16.msra.mxu0 %v1325
      %1609 = vmatprep.subr.bf16.mxu0 %v1330
      %1610 = vmatpush1.bf16.msra.mxu0 %v1329
      %1611 = vmatprep.subr.bf16.mxu0 %v1334
      %1612 = vmatpush1.bf16.msra.mxu0 %v1333
      %1613 = vmatprep.subr.bf16.mxu0 %v1338
      %1614 = vmatpush1.bf16.msra.mxu0 %v1337
      %1615 = vmatprep.subr.bf16.mxu0 %v1342
      %1616 = vmatpush1.bf16.msra.mxu0 %v1341
      %1617 = vmatprep.subr.bf16.mxu0 0
      %1618 = vmatpush1.bf16.msra.mxu0 0
      %1619 = vmatprep.subr.bf16.mxu0 0
      %1620 = vmatpush1.bf16.msra.mxu0 0
      %1621 = vmatprep.subr.bf16.mxu0 0
      %1622 = vmatpush1.bf16.msra.mxu0 0
      %1623 = vmatprep.subr.bf16.mxu0 0
      %1624 = vmatpush1.bf16.msra.mxu0 0
      %1625 = vmatprep.subr.bf16.mxu0 0
      %1626 = vmatpush1.bf16.msra.mxu0 0
      %1627 = vmatprep.subr.bf16.mxu0 0
      %1628 = vmatpush1.bf16.msra.mxu0 0
      %1629 = vmatprep.subr.bf16.mxu0 0
      %1630 = vmatpush1.bf16.msra.mxu0 0
      %1631 = vmatprep.subr.bf16.mxu0 0
      %1632 = vmatpush1.bf16.msra.mxu0 0
      %1633 = vmatprep.mubr.bf16.mxu0 0
      %1634 = vmatmul.mubr.bf16.gmra.mrb[0].mxu0 %v1472
      %v1635 = vpop.f32.mrb[0].mxu0
      %v1636 = vadd.f32 %v1363, %v1635
      %v1637 = vpop.f32.mrb[0].mxu0
      %v1638 = vadd.f32 %v1363, %v1637
      %v1639 = vpop.f32.mrb[0].mxu0
      %v1640 = vadd.f32 %v1368, %v1639
      %v1641 = vpop.f32.mrb[0].mxu0
      %v1642 = vadd.f32 %v1368, %v1641
      %1643 = vmatprep.mubr.bf16.mxu0 0
      %1644 = vmatmul.mubr.bf16.gmra.mrb[0].mxu0 %v1473
      %v1645 = vpop.f32.mrb[0].mxu0
      %v1646 = vadd.f32 %v1373, %v1645
      %v1647 = vpop.f32.mrb[0].mxu0
      %v1648 = vadd.f32 %v1373, %v1647
      %v1649 = vpop.f32.mrb[0].mxu0
      %v1650 = vadd.f32 %v1378, %v1649
      %v1651 = vpop.f32.mrb[0].mxu0
      %v1652 = vadd.f32 %v1378, %v1651
      %1653 = vmatprep.mubr.bf16.mxu0 0
      %1654 = vmatmul.mubr.bf16.gmra.mrb[0].mxu0 %v1474
      %v1655 = vpop.f32.mrb[0].mxu0
      %v1656 = vadd.f32 %v1383, %v1655
      %v1657 = vpop.f32.mrb[0].mxu0
      %v1658 = vadd.f32 %v1383, %v1657
      %v1659 = vpop.f32.mrb[0].mxu0
      %v1660 = vadd.f32 %v1388, %v1659
      %v1661 = vpop.f32.mrb[0].mxu0
      %v1662 = vadd.f32 %v1388, %v1661
      %1663 = vmatprep.mubr.bf16.mxu0 0
      %1664 = vmatmul.mubr.bf16.gmra.mrb[0].mxu0 %v1475
      %v1665 = vpop.f32.mrb[0].mxu0
      %v1666 = vadd.f32 %v1393, %v1665
      %v1667 = vpop.f32.mrb[0].mxu0
      %v1668 = vadd.f32 %v1393, %v1667
      %v1669 = vpop.f32.mrb[0].mxu0
      %v1670 = vadd.f32 %v1398, %v1669
      %v1671 = vpop.f32.mrb[0].mxu0
      %v1672 = vadd.f32 %v1398, %v1671
      %1673 = vmatprep.mubr.bf16.mxu0 0
      %1674 = vmatmul.mubr.bf16.gmra.mrb[0].mxu0 %v1476
      %v1675 = vpop.f32.mrb[0].mxu0
      %v1676 = vadd.f32 %v1403, %v1675
      %v1677 = vpop.f32.mrb[0].mxu0
      %v1678 = vadd.f32 %v1403, %v1677
      %v1679 = vpop.f32.mrb[0].mxu0
      %v1680 = vadd.f32 %v1408, %v1679
      %v1681 = vpop.f32.mrb[0].mxu0
      %v1682 = vadd.f32 %v1408, %v1681
      %1683 = vmatprep.mubr.bf16.mxu0 0
      %1684 = vmatmul.mubr.bf16.gmra.mrb[0].mxu0 %v1477
      %v1685 = vpop.f32.mrb[0].mxu0
      %v1686 = vadd.f32 %v1413, %v1685
      %v1687 = vpop.f32.mrb[0].mxu0
      %v1688 = vadd.f32 %v1413, %v1687
      %v1689 = vpop.f32.mrb[0].mxu0
      %v1690 = vadd.f32 %v1418, %v1689
      %v1691 = vpop.f32.mrb[0].mxu0
      %v1692 = vadd.f32 %v1418, %v1691
      %1693 = vmatprep.mubr.bf16.mxu0 0
      %1694 = vmatmul.mubr.bf16.gmra.mrb[0].mxu0 %v1478
      %v1695 = vpop.f32.mrb[0].mxu0
      %v1696 = vadd.f32 %v1423, %v1695
      %v1697 = vpop.f32.mrb[0].mxu0
      %v1698 = vadd.f32 %v1423, %v1697
      %v1699 = vpop.f32.mrb[0].mxu0
      %v1700 = vadd.f32 %v1428, %v1699
      %v1701 = vpop.f32.mrb[0].mxu0
      %v1702 = vadd.f32 %v1428, %v1701
      %1703 = vmatprep.mubr.bf16.mxu0 0
      %1704 = vmatmul.mubr.bf16.gmra.mrb[0].mxu0 %v1479
      %v1705 = vpop.f32.mrb[0].mxu0
      %v1706 = vadd.f32 %v1433, %v1705
      %v1707 = vpop.f32.mrb[0].mxu0
      %v1708 = vadd.f32 %v1433, %v1707
      %v1709 = vpop.f32.mrb[0].mxu0
      %v1710 = vadd.f32 %v1438, %v1709
      %v1711 = vpop.f32.mrb[0].mxu0
      %v1712 = vadd.f32 %v1438, %v1711
      %1713 = vdwg.mxu0
      %v1714 = vtanh.pop %v1523
      %v1715 = vtanh.pop %v1525
      %v1716 = vtanh.pop %v1636
      %v1717 = vtanh.pop %v1638
      %v1718 = vtanh.pop %v1527
      %v1719 = vtanh.pop %v1529
      %v1720 = vtanh.pop %v1640
      %v1721 = vtanh.pop %v1642
      %v1722 = vtanh.pop %v1533
      %v1723 = vtanh.pop %v1535
      %v1724 = vtanh.pop %v1646
      %v1725 = vtanh.pop %v1648
      %v1726 = vtanh.pop %v1537
      %v1727 = vtanh.pop %v1539
      %v1728 = vtanh.pop %v1650
      %v1729 = vtanh.pop %v1652
      %v1730 = vtanh.pop %v1543
      %v1731 = vtanh.pop %v1545
      %v1732 = vtanh.pop %v1656
      %v1733 = vtanh.pop %v1658
      %v1734 = vtanh.pop %v1547
      %v1735 = vtanh.pop %v1549
      %v1736 = vtanh.pop %v1660
      %v1737 = vtanh.pop %v1662
      %v1738 = vtanh.pop %v1553
      %v1739 = vtanh.pop %v1555
      %v1740 = vtanh.pop %v1666
      %v1741 = vtanh.pop %v1668
      %v1742 = vtanh.pop %v1557
      %v1743 = vtanh.pop %v1559
      %v1744 = vtanh.pop %v1670
      %v1745 = vtanh.pop %v1672
      %v1746 = vtanh.pop %v1563
      %v1747 = vtanh.pop %v1565
      %v1748 = vtanh.pop %v1676
      %v1749 = vtanh.pop %v1678
      %v1750 = vtanh.pop %v1567
      %v1751 = vtanh.pop %v1569
      %v1752 = vtanh.pop %v1680
      %v1753 = vtanh.pop %v1682
      %v1754 = vtanh.pop %v1573
      %v1755 = vtanh.pop %v1575
      %v1756 = vtanh.pop %v1686
      %v1757 = vtanh.pop %v1688
      %v1758 = vtanh.pop %v1577
      %v1759 = vtanh.pop %v1579
      %v1760 = vtanh.pop %v1690
      %v1761 = vtanh.pop %v1692
      %v1762 = vtanh.pop %v1583
      %v1763 = vtanh.pop %v1585
      %v1764 = vtanh.pop %v1696
      %v1765 = vtanh.pop %v1698
      %v1766 = vtanh.pop %v1587
      %v1767 = vtanh.pop %v1589
      %v1768 = vtanh.pop %v1700
      %v1769 = vtanh.pop %v1702
      %v1770 = vtanh.pop %v1593
      %v1771 = vtanh.pop %v1595
      %v1772 = vtanh.pop %v1706
      %v1773 = vtanh.pop %v1708
      %v1774 = vtanh.pop %v1597
      %v1775 = vtanh.pop %v1599
      %v1776 = vtanh.pop %v1710
      %v1777 = vtanh.pop %v1712
      %s1778 = scalar_lea.vmem %s1, 192
      %v1779 = vld [vmem:[%s1778] sm:$0xf]
      %v1780 = vld [vmem:[%s1778 + $0x4] sm:$0xf]
      %v1781 = vld [vmem:[%s1778 + $0x8] sm:$0xf]
      %v1782 = vld [vmem:[%s1778 + $0xc] sm:$0xf]
      %v1783 = vld [vmem:[%s1778 + $0x10] sm:$0xf]
      %v1784 = vld [vmem:[%s1778 + $0x14] sm:$0xf]
      %v1785 = vld [vmem:[%s1778 + $0x18] sm:$0xf]
      %v1786 = vld [vmem:[%s1778 + $0x1c] sm:$0xf]
      %v1787 = vld [vmem:[%s1778 + $0x20] sm:$0xf]
      %v1788 = vld [vmem:[%s1778 + $0x24] sm:$0xf]
      %v1789 = vld [vmem:[%s1778 + $0x28] sm:$0xf]
      %v1790 = vld [vmem:[%s1778 + $0x2c] sm:$0xf]
      %v1791 = vld [vmem:[%s1778 + $0x30] sm:$0xf]
      %v1792 = vld [vmem:[%s1778 + $0x34] sm:$0xf]
      %v1793 = vld [vmem:[%s1778 + $0x38] sm:$0xf]
      %v1794 = vld [vmem:[%s1778 + $0x3c] sm:$0xf]
      %v1795 = vpack.c.bf16 %v1718, %v1714
      %v1796 = vpack.c.bf16 %v1719, %v1715
      %v1797 = vpack.c.bf16 %v1720, %v1716
      %v1798 = vpack.c.bf16 %v1721, %v1717
      %v1799 = vpack.c.bf16 %v1726, %v1722
      %v1800 = vpack.c.bf16 %v1727, %v1723
      %v1801 = vpack.c.bf16 %v1728, %v1724
      %v1802 = vpack.c.bf16 %v1729, %v1725
      %v1803 = vpack.c.bf16 %v1734, %v1730
      %v1804 = vpack.c.bf16 %v1735, %v1731
      %v1805 = vpack.c.bf16 %v1736, %v1732
      %v1806 = vpack.c.bf16 %v1737, %v1733
      %v1807 = vpack.c.bf16 %v1742, %v1738
      %v1808 = vpack.c.bf16 %v1743, %v1739
      %v1809 = vpack.c.bf16 %v1744, %v1740
      %v1810 = vpack.c.bf16 %v1745, %v1741
      %v1811 = vpack.c.bf16 %v1750, %v1746
      %v1812 = vpack.c.bf16 %v1751, %v1747
      %v1813 = vpack.c.bf16 %v1752, %v1748
      %v1814 = vpack.c.bf16 %v1753, %v1749
      %v1815 = vpack.c.bf16 %v1758, %v1754
      %v1816 = vpack.c.bf16 %v1759, %v1755
      %v1817 = vpack.c.bf16 %v1760, %v1756
      %v1818 = vpack.c.bf16 %v1761, %v1757
      %v1819 = vpack.c.bf16 %v1766, %v1762
      %v1820 = vpack.c.bf16 %v1767, %v1763
      %v1821 = vpack.c.bf16 %v1768, %v1764
      %v1822 = vpack.c.bf16 %v1769, %v1765
      %v1823 = vpack.c.bf16 %v1774, %v1770
      %v1824 = vpack.c.bf16 %v1775, %v1771
      %v1825 = vpack.c.bf16 %v1776, %v1772
      %v1826 = vpack.c.bf16 %v1777, %v1773
      %s1827 = scalar_lea.vmem %s2, 384
      %v1828 = vld [vmem:[%s1827] sm:$0xff]
      %v1829 = vld [vmem:[%s1827 + $0x8] sm:$0xff]
      %v1830 = vld [vmem:[%s1827 + $0x10] sm:$0xff]
      %v1831 = vld [vmem:[%s1827 + $0x18] sm:$0xff]
      %v1832 = vld [vmem:[%s1827 + $0x20] sm:$0xff]
      %v1833 = vld [vmem:[%s1827 + $0x28] sm:$0xff]
      %v1834 = vld [vmem:[%s1827 + $0x30] sm:$0xff]
      %v1835 = vld [vmem:[%s1827 + $0x38] sm:$0xff]
      %v1836 = vld [vmem:[%s1827 + $0x40] sm:$0xff]
      %v1837 = vld [vmem:[%s1827 + $0x48] sm:$0xff]
      %v1838 = vld [vmem:[%s1827 + $0x50] sm:$0xff]
      %v1839 = vld [vmem:[%s1827 + $0x58] sm:$0xff]
      %v1840 = vld [vmem:[%s1827 + $0x60] sm:$0xff]
      %v1841 = vld [vmem:[%s1827 + $0x68] sm:$0xff]
      %v1842 = vld [vmem:[%s1827 + $0x70] sm:$0xff]
      %v1843 = vld [vmem:[%s1827 + $0x78] sm:$0xff]
      %1845 = vset.pattern.permute.xlu0 0
      %1846 = vperm.xlu0 %1845, %v1828
      %v1847 = vpop.permute.xlu0 %1846
      %1850 = vset.pattern.permute.xlu0 0
      %1851 = vperm.xlu0 %1850, %v1829
      %v1852 = vpop.permute.xlu0 %1851
      %1855 = vset.pattern.permute.xlu0 0
      %1856 = vperm.xlu0 %1855, %v1830
      %v1857 = vpop.permute.xlu0 %1856
      %1860 = vset.pattern.permute.xlu0 0
      %1861 = vperm.xlu0 %1860, %v1831
      %v1862 = vpop.permute.xlu0 %1861
      %1865 = vset.pattern.permute.xlu0 0
      %1866 = vperm.xlu0 %1865, %v1832
      %v1867 = vpop.permute.xlu0 %1866
      %1870 = vset.pattern.permute.xlu0 0
      %1871 = vperm.xlu0 %1870, %v1833
      %v1872 = vpop.permute.xlu0 %1871
      %1875 = vset.pattern.permute.xlu0 0
      %1876 = vperm.xlu0 %1875, %v1834
      %v1877 = vpop.permute.xlu0 %1876
      %1880 = vset.pattern.permute.xlu0 0
      %1881 = vperm.xlu0 %1880, %v1835
      %v1882 = vpop.permute.xlu0 %1881
      %1885 = vset.pattern.permute.xlu0 0
      %1886 = vperm.xlu0 %1885, %v1836
      %v1887 = vpop.permute.xlu0 %1886
      %1890 = vset.pattern.permute.xlu0 0
      %1891 = vperm.xlu0 %1890, %v1837
      %v1892 = vpop.permute.xlu0 %1891
      %1895 = vset.pattern.permute.xlu0 0
      %1896 = vperm.xlu0 %1895, %v1838
      %v1897 = vpop.permute.xlu0 %1896
      %1900 = vset.pattern.permute.xlu0 0
      %1901 = vperm.xlu0 %1900, %v1839
      %v1902 = vpop.permute.xlu0 %1901
      %1905 = vset.pattern.permute.xlu0 0
      %1906 = vperm.xlu0 %1905, %v1840
      %v1907 = vpop.permute.xlu0 %1906
      %1910 = vset.pattern.permute.xlu0 0
      %1911 = vperm.xlu0 %1910, %v1841
      %v1912 = vpop.permute.xlu0 %1911
      %1915 = vset.pattern.permute.xlu0 0
      %1916 = vperm.xlu0 %1915, %v1842
      %v1917 = vpop.permute.xlu0 %1916
      %1920 = vset.pattern.permute.xlu0 0
      %1921 = vperm.xlu0 %1920, %v1843
      %v1922 = vpop.permute.xlu0 %1921
      %v1940 = vunpack.c.l.b16 %v1779
      %v1941 = vunpack.c.l.b16 %v1780
      %v1942 = vunpack.c.l.b16 %v1781
      %v1943 = vunpack.c.l.b16 %v1782
      %v1944 = vunpack.c.l.b16 %v1783
      %v1945 = vunpack.c.l.b16 %v1784
      %v1946 = vunpack.c.l.b16 %v1785
      %v1947 = vunpack.c.l.b16 %v1786
      %v1948 = vunpack.c.l.b16 %v1787
      %v1949 = vunpack.c.l.b16 %v1788
      %v1950 = vunpack.c.l.b16 %v1789
      %v1951 = vunpack.c.l.b16 %v1790
      %v1952 = vunpack.c.l.b16 %v1791
      %v1953 = vunpack.c.l.b16 %v1792
      %v1954 = vunpack.c.l.b16 %v1793
      %v1955 = vunpack.c.l.b16 %v1794
      %v1956 = vpack.c.b16 %v1941, %v1940
      %v1957 = vpack.c.b16 %v1943, %v1942
      %v1958 = vpack.c.b16 %v1945, %v1944
      %v1959 = vpack.c.b16 %v1947, %v1946
      %v1960 = vpack.c.b16 %v1949, %v1948
      %v1961 = vpack.c.b16 %v1951, %v1950
      %v1962 = vpack.c.b16 %v1953, %v1952
      %v1963 = vpack.c.b16 %v1955, %v1954
      %1972 = vmatprep.subr.bf16.mxu0 %v1796
      %1973 = vmatpush1.bf16.msra.mxu0 %v1795
      %1974 = vmatprep.subr.bf16.mxu0 %v1800
      %1975 = vmatpush1.bf16.msra.mxu0 %v1799
      %1976 = vmatprep.subr.bf16.mxu0 %v1804
      %1977 = vmatpush1.bf16.msra.mxu0 %v1803
      %1978 = vmatprep.subr.bf16.mxu0 %v1808
      %1979 = vmatpush1.bf16.msra.mxu0 %v1807
      %1980 = vmatprep.subr.bf16.mxu0 %v1812
      %1981 = vmatpush1.bf16.msra.mxu0 %v1811
      %1982 = vmatprep.subr.bf16.mxu0 %v1816
      %1983 = vmatpush1.bf16.msra.mxu0 %v1815
      %1984 = vmatprep.subr.bf16.mxu0 %v1820
      %1985 = vmatpush1.bf16.msra.mxu0 %v1819
      %1986 = vmatprep.subr.bf16.mxu0 %v1824
      %1987 = vmatpush1.bf16.msra.mxu0 %v1823
      %1988 = vmatprep.subr.bf16.mxu0 0
      %1989 = vmatpush1.bf16.msra.mxu0 0
      %1990 = vmatprep.subr.bf16.mxu0 0
      %1991 = vmatpush1.bf16.msra.mxu0 0
      %1992 = vmatprep.subr.bf16.mxu0 0
      %1993 = vmatpush1.bf16.msra.mxu0 0
      %1994 = vmatprep.subr.bf16.mxu0 0
      %1995 = vmatpush1.bf16.msra.mxu0 0
      %1996 = vmatprep.subr.bf16.mxu0 0
      %1997 = vmatpush1.bf16.msra.mxu0 0
      %1998 = vmatprep.subr.bf16.mxu0 0
      %1999 = vmatpush1.bf16.msra.mxu0 0
      %2000 = vmatprep.subr.bf16.mxu0 0
      %2001 = vmatpush1.bf16.msra.mxu0 0
      %2002 = vmatprep.subr.bf16.mxu0 0
      %2003 = vmatpush1.bf16.msra.mxu0 0
      %2004 = vmatprep.mubr.bf16.mxu0 0
      %2005 = vmatmul.mubr.bf16.gmra.mrb[0].mxu0 %v1956
      %v2006 = vpop.f32.mrb[0].mxu0
      %v2007 = vadd.f32 %v1847, %v2006
      %v2008 = vpop.f32.mrb[0].mxu0
      %v2009 = vadd.f32 %v1847, %v2008
      %v2010 = vpop.f32.mrb[0].mxu0
      %v2011 = vadd.f32 %v1852, %v2010
      %v2012 = vpop.f32.mrb[0].mxu0
      %v2013 = vadd.f32 %v1852, %v2012
      %2014 = vmatprep.mubr.bf16.mxu0 0
      %2015 = vmatmul.mubr.bf16.gmra.mrb[0].mxu0 %v1957
      %v2016 = vpop.f32.mrb[0].mxu0
      %v2017 = vadd.f32 %v1857, %v2016
      %v2018 = vpop.f32.mrb[0].mxu0
      %v2019 = vadd.f32 %v1857, %v2018
      %v2020 = vpop.f32.mrb[0].mxu0
      %v2021 = vadd.f32 %v1862, %v2020
      %v2022 = vpop.f32.mrb[0].mxu0
      %v2023 = vadd.f32 %v1862, %v2022
      %2024 = vmatprep.mubr.bf16.mxu0 0
      %2025 = vmatmul.mubr.bf16.gmra.mrb[0].mxu0 %v1958
      %v2026 = vpop.f32.mrb[0].mxu0
      %v2027 = vadd.f32 %v1867, %v2026
      %v2028 = vpop.f32.mrb[0].mxu0
      %v2029 = vadd.f32 %v1867, %v2028
      %v2030 = vpop.f32.mrb[0].mxu0
      %v2031 = vadd.f32 %v1872, %v2030
      %v2032 = vpop.f32.mrb[0].mxu0
      %v2033 = vadd.f32 %v1872, %v2032
      %2034 = vmatprep.mubr.bf16.mxu0 0
      %2035 = vmatmul.mubr.bf16.gmra.mrb[0].mxu0 %v1959
      %v2036 = vpop.f32.mrb[0].mxu0
      %v2037 = vadd.f32 %v1877, %v2036
      %v2038 = vpop.f32.mrb[0].mxu0
      %v2039 = vadd.f32 %v1877, %v2038
      %v2040 = vpop.f32.mrb[0].mxu0
      %v2041 = vadd.f32 %v1882, %v2040
      %v2042 = vpop.f32.mrb[0].mxu0
      %v2043 = vadd.f32 %v1882, %v2042
      %2044 = vmatprep.mubr.bf16.mxu0 0
      %2045 = vmatmul.mubr.bf16.gmra.mrb[0].mxu0 %v1960
      %v2046 = vpop.f32.mrb[0].mxu0
      %v2047 = vadd.f32 %v1887, %v2046
      %v2048 = vpop.f32.mrb[0].mxu0
      %v2049 = vadd.f32 %v1887, %v2048
      %v2050 = vpop.f32.mrb[0].mxu0
      %v2051 = vadd.f32 %v1892, %v2050
      %v2052 = vpop.f32.mrb[0].mxu0
      %v2053 = vadd.f32 %v1892, %v2052
      %2054 = vmatprep.mubr.bf16.mxu0 0
      %2055 = vmatmul.mubr.bf16.gmra.mrb[0].mxu0 %v1961
      %v2056 = vpop.f32.mrb[0].mxu0
      %v2057 = vadd.f32 %v1897, %v2056
      %v2058 = vpop.f32.mrb[0].mxu0
      %v2059 = vadd.f32 %v1897, %v2058
      %v2060 = vpop.f32.mrb[0].mxu0
      %v2061 = vadd.f32 %v1902, %v2060
      %v2062 = vpop.f32.mrb[0].mxu0
      %v2063 = vadd.f32 %v1902, %v2062
      %2064 = vmatprep.mubr.bf16.mxu0 0
      %2065 = vmatmul.mubr.bf16.gmra.mrb[0].mxu0 %v1962
      %v2066 = vpop.f32.mrb[0].mxu0
      %v2067 = vadd.f32 %v1907, %v2066
      %v2068 = vpop.f32.mrb[0].mxu0
      %v2069 = vadd.f32 %v1907, %v2068
      %v2070 = vpop.f32.mrb[0].mxu0
      %v2071 = vadd.f32 %v1912, %v2070
      %v2072 = vpop.f32.mrb[0].mxu0
      %v2073 = vadd.f32 %v1912, %v2072
      %2074 = vmatprep.mubr.bf16.mxu0 0
      %2075 = vmatmul.mubr.bf16.gmra.mrb[0].mxu0 %v1963
      %v2076 = vpop.f32.mrb[0].mxu0
      %v2077 = vadd.f32 %v1917, %v2076
      %v2078 = vpop.f32.mrb[0].mxu0
      %v2079 = vadd.f32 %v1917, %v2078
      %v2080 = vpop.f32.mrb[0].mxu0
      %v2081 = vadd.f32 %v1922, %v2080
      %v2082 = vpop.f32.mrb[0].mxu0
      %v2083 = vadd.f32 %v1922, %v2082
      %2084 = vdwg.mxu0
      %2085 = vmatprep.subr.bf16.mxu0 %v1798
      %2086 = vmatpush1.bf16.msra.mxu0 %v1797
      %2087 = vmatprep.subr.bf16.mxu0 %v1802
      %2088 = vmatpush1.bf16.msra.mxu0 %v1801
      %2089 = vmatprep.subr.bf16.mxu0 %v1806
      %2090 = vmatpush1.bf16.msra.mxu0 %v1805
      %2091 = vmatprep.subr.bf16.mxu0 %v1810
      %2092 = vmatpush1.bf16.msra.mxu0 %v1809
      %2093 = vmatprep.subr.bf16.mxu0 %v1814
      %2094 = vmatpush1.bf16.msra.mxu0 %v1813
      %2095 = vmatprep.subr.bf16.mxu0 %v1818
      %2096 = vmatpush1.bf16.msra.mxu0 %v1817
      %2097 = vmatprep.subr.bf16.mxu0 %v1822
      %2098 = vmatpush1.bf16.msra.mxu0 %v1821
      %2099 = vmatprep.subr.bf16.mxu0 %v1826
      %2100 = vmatpush1.bf16.msra.mxu0 %v1825
      %2101 = vmatprep.subr.bf16.mxu0 0
      %2102 = vmatpush1.bf16.msra.mxu0 0
      %2103 = vmatprep.subr.bf16.mxu0 0
      %2104 = vmatpush1.bf16.msra.mxu0 0
      %2105 = vmatprep.subr.bf16.mxu0 0
      %2106 = vmatpush1.bf16.msra.mxu0 0
      %2107 = vmatprep.subr.bf16.mxu0 0
      %2108 = vmatpush1.bf16.msra.mxu0 0
      %2109 = vmatprep.subr.bf16.mxu0 0
      %2110 = vmatpush1.bf16.msra.mxu0 0
      %2111 = vmatprep.subr.bf16.mxu0 0
      %2112 = vmatpush1.bf16.msra.mxu0 0
      %2113 = vmatprep.subr.bf16.mxu0 0
      %2114 = vmatpush1.bf16.msra.mxu0 0
      %2115 = vmatprep.subr.bf16.mxu0 0
      %2116 = vmatpush1.bf16.msra.mxu0 0
      %2117 = vmatprep.mubr.bf16.mxu0 0
      %2118 = vmatmul.mubr.bf16.gmra.mrb[0].mxu0 %v1956
      %v2119 = vpop.f32.mrb[0].mxu0
      %v2120 = vadd.f32 %v1847, %v2119
      %v2121 = vpop.f32.mrb[0].mxu0
      %v2122 = vadd.f32 %v1847, %v2121
      %v2123 = vpop.f32.mrb[0].mxu0
      %v2124 = vadd.f32 %v1852, %v2123
      %v2125 = vpop.f32.mrb[0].mxu0
      %v2126 = vadd.f32 %v1852, %v2125
      %2127 = vmatprep.mubr.bf16.mxu0 0
      %2128 = vmatmul.mubr.bf16.gmra.mrb[0].mxu0 %v1957
      %v2129 = vpop.f32.mrb[0].mxu0
      %v2130 = vadd.f32 %v1857, %v2129
      %v2131 = vpop.f32.mrb[0].mxu0
      %v2132 = vadd.f32 %v1857, %v2131
      %v2133 = vpop.f32.mrb[0].mxu0
      %v2134 = vadd.f32 %v1862, %v2133
      %v2135 = vpop.f32.mrb[0].mxu0
      %v2136 = vadd.f32 %v1862, %v2135
      %2137 = vmatprep.mubr.bf16.mxu0 0
      %2138 = vmatmul.mubr.bf16.gmra.mrb[0].mxu0 %v1958
      %v2139 = vpop.f32.mrb[0].mxu0
      %v2140 = vadd.f32 %v1867, %v2139
      %v2141 = vpop.f32.mrb[0].mxu0
      %v2142 = vadd.f32 %v1867, %v2141
      %v2143 = vpop.f32.mrb[0].mxu0
      %v2144 = vadd.f32 %v1872, %v2143
      %v2145 = vpop.f32.mrb[0].mxu0
      %v2146 = vadd.f32 %v1872, %v2145
      %2147 = vmatprep.mubr.bf16.mxu0 0
      %2148 = vmatmul.mubr.bf16.gmra.mrb[0].mxu0 %v1959
      %v2149 = vpop.f32.mrb[0].mxu0
      %v2150 = vadd.f32 %v1877, %v2149
      %v2151 = vpop.f32.mrb[0].mxu0
      %v2152 = vadd.f32 %v1877, %v2151
      %v2153 = vpop.f32.mrb[0].mxu0
      %v2154 = vadd.f32 %v1882, %v2153
      %v2155 = vpop.f32.mrb[0].mxu0
      %v2156 = vadd.f32 %v1882, %v2155
      %2157 = vmatprep.mubr.bf16.mxu0 0
      %2158 = vmatmul.mubr.bf16.gmra.mrb[0].mxu0 %v1960
      %v2159 = vpop.f32.mrb[0].mxu0
      %v2160 = vadd.f32 %v1887, %v2159
      %v2161 = vpop.f32.mrb[0].mxu0
      %v2162 = vadd.f32 %v1887, %v2161
      %v2163 = vpop.f32.mrb[0].mxu0
      %v2164 = vadd.f32 %v1892, %v2163
      %v2165 = vpop.f32.mrb[0].mxu0
      %v2166 = vadd.f32 %v1892, %v2165
      %2167 = vmatprep.mubr.bf16.mxu0 0
      %2168 = vmatmul.mubr.bf16.gmra.mrb[0].mxu0 %v1961
      %v2169 = vpop.f32.mrb[0].mxu0
      %v2170 = vadd.f32 %v1897, %v2169
      %v2171 = vpop.f32.mrb[0].mxu0
      %v2172 = vadd.f32 %v1897, %v2171
      %v2173 = vpop.f32.mrb[0].mxu0
      %v2174 = vadd.f32 %v1902, %v2173
      %v2175 = vpop.f32.mrb[0].mxu0
      %v2176 = vadd.f32 %v1902, %v2175
      %2177 = vmatprep.mubr.bf16.mxu0 0
      %2178 = vmatmul.mubr.bf16.gmra.mrb[0].mxu0 %v1962
      %v2179 = vpop.f32.mrb[0].mxu0
      %v2180 = vadd.f32 %v1907, %v2179
      %v2181 = vpop.f32.mrb[0].mxu0
      %v2182 = vadd.f32 %v1907, %v2181
      %v2183 = vpop.f32.mrb[0].mxu0
      %v2184 = vadd.f32 %v1912, %v2183
      %v2185 = vpop.f32.mrb[0].mxu0
      %v2186 = vadd.f32 %v1912, %v2185
      %2187 = vmatprep.mubr.bf16.mxu0 0
      %2188 = vmatmul.mubr.bf16.gmra.mrb[0].mxu0 %v1963
      %v2189 = vpop.f32.mrb[0].mxu0
      %v2190 = vadd.f32 %v1917, %v2189
      %v2191 = vpop.f32.mrb[0].mxu0
      %v2192 = vadd.f32 %v1917, %v2191
      %v2193 = vpop.f32.mrb[0].mxu0
      %v2194 = vadd.f32 %v1922, %v2193
      %v2195 = vpop.f32.mrb[0].mxu0
      %v2196 = vadd.f32 %v1922, %v2195
      %2197 = vdwg.mxu0
      %v2198 = vtanh.pop %v2007
      %v2199 = vtanh.pop %v2009
      %v2200 = vtanh.pop %v2120
      %v2201 = vtanh.pop %v2122
      %v2202 = vtanh.pop %v2011
      %v2203 = vtanh.pop %v2013
      %v2204 = vtanh.pop %v2124
      %v2205 = vtanh.pop %v2126
      %v2206 = vtanh.pop %v2017
      %v2207 = vtanh.pop %v2019
      %v2208 = vtanh.pop %v2130
      %v2209 = vtanh.pop %v2132
      %v2210 = vtanh.pop %v2021
      %v2211 = vtanh.pop %v2023
      %v2212 = vtanh.pop %v2134
      %v2213 = vtanh.pop %v2136
      %v2214 = vtanh.pop %v2027
      %v2215 = vtanh.pop %v2029
      %v2216 = vtanh.pop %v2140
      %v2217 = vtanh.pop %v2142
      %v2218 = vtanh.pop %v2031
      %v2219 = vtanh.pop %v2033
      %v2220 = vtanh.pop %v2144
      %v2221 = vtanh.pop %v2146
      %v2222 = vtanh.pop %v2037
      %v2223 = vtanh.pop %v2039
      %v2224 = vtanh.pop %v2150
      %v2225 = vtanh.pop %v2152
      %v2226 = vtanh.pop %v2041
      %v2227 = vtanh.pop %v2043
      %v2228 = vtanh.pop %v2154
      %v2229 = vtanh.pop %v2156
      %v2230 = vtanh.pop %v2047
      %v2231 = vtanh.pop %v2049
      %v2232 = vtanh.pop %v2160
      %v2233 = vtanh.pop %v2162
      %v2234 = vtanh.pop %v2051
      %v2235 = vtanh.pop %v2053
      %v2236 = vtanh.pop %v2164
      %v2237 = vtanh.pop %v2166
      %v2238 = vtanh.pop %v2057
      %v2239 = vtanh.pop %v2059
      %v2240 = vtanh.pop %v2170
      %v2241 = vtanh.pop %v2172
      %v2242 = vtanh.pop %v2061
      %v2243 = vtanh.pop %v2063
      %v2244 = vtanh.pop %v2174
      %v2245 = vtanh.pop %v2176
      %v2246 = vtanh.pop %v2067
      %v2247 = vtanh.pop %v2069
      %v2248 = vtanh.pop %v2180
      %v2249 = vtanh.pop %v2182
      %v2250 = vtanh.pop %v2071
      %v2251 = vtanh.pop %v2073
      %v2252 = vtanh.pop %v2184
      %v2253 = vtanh.pop %v2186
      %v2254 = vtanh.pop %v2077
      %v2255 = vtanh.pop %v2079
      %v2256 = vtanh.pop %v2190
      %v2257 = vtanh.pop %v2192
      %v2258 = vtanh.pop %v2081
      %v2259 = vtanh.pop %v2083
      %v2260 = vtanh.pop %v2194
      %v2261 = vtanh.pop %v2196
      %s2262 = scalar_lea.vmem %s1, 256
      %v2263 = vld [vmem:[%s2262] sm:$0xf]
      %v2264 = vld [vmem:[%s2262 + $0x4] sm:$0xf]
      %v2265 = vld [vmem:[%s2262 + $0x8] sm:$0xf]
      %v2266 = vld [vmem:[%s2262 + $0xc] sm:$0xf]
      %v2267 = vld [vmem:[%s2262 + $0x10] sm:$0xf]
      %v2268 = vld [vmem:[%s2262 + $0x14] sm:$0xf]
      %v2269 = vld [vmem:[%s2262 + $0x18] sm:$0xf]
      %v2270 = vld [vmem:[%s2262 + $0x1c] sm:$0xf]
      %v2271 = vld [vmem:[%s2262 + $0x20] sm:$0xf]
      %v2272 = vld [vmem:[%s2262 + $0x24] sm:$0xf]
      %v2273 = vld [vmem:[%s2262 + $0x28] sm:$0xf]
      %v2274 = vld [vmem:[%s2262 + $0x2c] sm:$0xf]
      %v2275 = vld [vmem:[%s2262 + $0x30] sm:$0xf]
      %v2276 = vld [vmem:[%s2262 + $0x34] sm:$0xf]
      %v2277 = vld [vmem:[%s2262 + $0x38] sm:$0xf]
      %v2278 = vld [vmem:[%s2262 + $0x3c] sm:$0xf]
      %v2279 = vunpack.c.l.bf16 %v2263
      %v2280 = vunpack.c.l.bf16 %v2264
      %v2281 = vunpack.c.l.bf16 %v2265
      %v2282 = vunpack.c.l.bf16 %v2266
      %v2283 = vunpack.c.l.bf16 %v2267
      %v2284 = vunpack.c.l.bf16 %v2268
      %v2285 = vunpack.c.l.bf16 %v2269
      %v2286 = vunpack.c.l.bf16 %v2270
      %v2287 = vunpack.c.l.bf16 %v2271
      %v2288 = vunpack.c.l.bf16 %v2272
      %v2289 = vunpack.c.l.bf16 %v2273
      %v2290 = vunpack.c.l.bf16 %v2274
      %v2291 = vunpack.c.l.bf16 %v2275
      %v2292 = vunpack.c.l.bf16 %v2276
      %v2293 = vunpack.c.l.bf16 %v2277
      %v2294 = vunpack.c.l.bf16 %v2278
      %s2295 = scalar_lea.vmem %s2, 512
      %v2296 = vld [vmem:[%s2295] sm:$0xff]
      %2298 = vset.pattern.permute.xlu0 0
      %2299 = vperm.xlu0 %2298, %v2279
      %v2300 = vpop.permute.xlu0 %2299
      %2303 = vset.pattern.permute.xlu0 0
      %2304 = vperm.xlu0 %2303, %v2280
      %v2305 = vpop.permute.xlu0 %2304
      %2308 = vset.pattern.permute.xlu0 0
      %2309 = vperm.xlu0 %2308, %v2281
      %v2310 = vpop.permute.xlu0 %2309
      %2313 = vset.pattern.permute.xlu0 0
      %2314 = vperm.xlu0 %2313, %v2282
      %v2315 = vpop.permute.xlu0 %2314
      %2318 = vset.pattern.permute.xlu0 0
      %2319 = vperm.xlu0 %2318, %v2283
      %v2320 = vpop.permute.xlu0 %2319
      %2323 = vset.pattern.permute.xlu0 0
      %2324 = vperm.xlu0 %2323, %v2284
      %v2325 = vpop.permute.xlu0 %2324
      %2328 = vset.pattern.permute.xlu0 0
      %2329 = vperm.xlu0 %2328, %v2285
      %v2330 = vpop.permute.xlu0 %2329
      %2333 = vset.pattern.permute.xlu0 0
      %2334 = vperm.xlu0 %2333, %v2286
      %v2335 = vpop.permute.xlu0 %2334
      %2338 = vset.pattern.permute.xlu0 0
      %2339 = vperm.xlu0 %2338, %v2287
      %v2340 = vpop.permute.xlu0 %2339
      %2343 = vset.pattern.permute.xlu0 0
      %2344 = vperm.xlu0 %2343, %v2288
      %v2345 = vpop.permute.xlu0 %2344
      %2348 = vset.pattern.permute.xlu0 0
      %2349 = vperm.xlu0 %2348, %v2289
      %v2350 = vpop.permute.xlu0 %2349
      %2353 = vset.pattern.permute.xlu0 0
      %2354 = vperm.xlu0 %2353, %v2290
      %v2355 = vpop.permute.xlu0 %2354
      %2358 = vset.pattern.permute.xlu0 0
      %2359 = vperm.xlu0 %2358, %v2291
      %v2360 = vpop.permute.xlu0 %2359
      %2363 = vset.pattern.permute.xlu0 0
      %2364 = vperm.xlu0 %2363, %v2292
      %v2365 = vpop.permute.xlu0 %2364
      %2368 = vset.pattern.permute.xlu0 0
      %2369 = vperm.xlu0 %2368, %v2293
      %v2370 = vpop.permute.xlu0 %2369
      %2373 = vset.pattern.permute.xlu0 0
      %2374 = vperm.xlu0 %2373, %v2294
      %v2375 = vpop.permute.xlu0 %2374
      %v2377 = vmul.f32 %v2198, %v2300
      %v2378 = vmul.f32 %v2199, %v2300
      %v2379 = vmul.f32 %v2200, %v2300
      %v2380 = vmul.f32 %v2201, %v2300
      %v2381 = vmul.f32 %v2202, %v2305
      %v2382 = vmul.f32 %v2203, %v2305
      %v2383 = vmul.f32 %v2204, %v2305
      %v2384 = vmul.f32 %v2205, %v2305
      %v2385 = vmul.f32 %v2206, %v2310
      %v2386 = vmul.f32 %v2207, %v2310
      %v2387 = vmul.f32 %v2208, %v2310
      %v2388 = vmul.f32 %v2209, %v2310
      %v2389 = vmul.f32 %v2210, %v2315
      %v2390 = vmul.f32 %v2211, %v2315
      %v2391 = vmul.f32 %v2212, %v2315
      %v2392 = vmul.f32 %v2213, %v2315
      %v2393 = vmul.f32 %v2214, %v2320
      %v2394 = vmul.f32 %v2215, %v2320
      %v2395 = vmul.f32 %v2216, %v2320
      %v2396 = vmul.f32 %v2217, %v2320
      %v2397 = vmul.f32 %v2218, %v2325
      %v2398 = vmul.f32 %v2219, %v2325
      %v2399 = vmul.f32 %v2220, %v2325
      %v2400 = vmul.f32 %v2221, %v2325
      %v2401 = vmul.f32 %v2222, %v2330
      %v2402 = vmul.f32 %v2223, %v2330
      %v2403 = vmul.f32 %v2224, %v2330
      %v2404 = vmul.f32 %v2225, %v2330
      %v2405 = vmul.f32 %v2226, %v2335
      %v2406 = vmul.f32 %v2227, %v2335
      %v2407 = vmul.f32 %v2228, %v2335
      %v2408 = vmul.f32 %v2229, %v2335
      %v2409 = vmul.f32 %v2230, %v2340
      %v2410 = vmul.f32 %v2231, %v2340
      %v2411 = vmul.f32 %v2232, %v2340
      %v2412 = vmul.f32 %v2233, %v2340
      %v2413 = vmul.f32 %v2234, %v2345
      %v2414 = vmul.f32 %v2235, %v2345
      %v2415 = vmul.f32 %v2236, %v2345
      %v2416 = vmul.f32 %v2237, %v2345
      %v2417 = vmul.f32 %v2238, %v2350
      %v2418 = vmul.f32 %v2239, %v2350
      %v2419 = vmul.f32 %v2240, %v2350
      %v2420 = vmul.f32 %v2241, %v2350
      %v2421 = vmul.f32 %v2242, %v2355
      %v2422 = vmul.f32 %v2243, %v2355
      %v2423 = vmul.f32 %v2244, %v2355
      %v2424 = vmul.f32 %v2245, %v2355
      %v2425 = vmul.f32 %v2246, %v2360
      %v2426 = vmul.f32 %v2247, %v2360
      %v2427 = vmul.f32 %v2248, %v2360
      %v2428 = vmul.f32 %v2249, %v2360
      %v2429 = vmul.f32 %v2250, %v2365
      %v2430 = vmul.f32 %v2251, %v2365
      %v2431 = vmul.f32 %v2252, %v2365
      %v2432 = vmul.f32 %v2253, %v2365
      %v2433 = vmul.f32 %v2254, %v2370
      %v2434 = vmul.f32 %v2255, %v2370
      %v2435 = vmul.f32 %v2256, %v2370
      %v2436 = vmul.f32 %v2257, %v2370
      %v2437 = vmul.f32 %v2258, %v2375
      %v2438 = vmul.f32 %v2259, %v2375
      %v2439 = vmul.f32 %v2260, %v2375
      %v2440 = vmul.f32 %v2261, %v2375
      %v2441 = vadd.f32 %v2377, %v2381
      %v2442 = vadd.f32 %v2441, %v2385
      %v2443 = vadd.f32 %v2442, %v2389
      %v2444 = vadd.f32 %v2443, %v2393
      %v2445 = vadd.f32 %v2444, %v2397
      %v2446 = vadd.f32 %v2445, %v2401
      %v2447 = vadd.f32 %v2446, %v2405
      %v2448 = vadd.f32 %v2447, %v2409
      %v2449 = vadd.f32 %v2448, %v2413
      %v2450 = vadd.f32 %v2449, %v2417
      %v2451 = vadd.f32 %v2450, %v2421
      %v2452 = vadd.f32 %v2451, %v2425
      %v2453 = vadd.f32 %v2452, %v2429
      %v2454 = vadd.f32 %v2453, %v2433
      %v2455 = vadd.f32 %v2454, %v2437
      %v2456 = vrot.slane %v2455, 4
      %v2457 = vadd.f32 %v2455, %v2456
      %v2458 = vrot.slane %v2457, 2
      %v2459 = vadd.f32 %v2457, %v2458
      %v2460 = vrot.slane %v2459, 1
      %v2461 = vadd.f32 %v2459, %v2460
      %v2462 = vadd.f32 %v2378, %v2382
      %v2463 = vadd.f32 %v2462, %v2386
      %v2464 = vadd.f32 %v2463, %v2390
      %v2465 = vadd.f32 %v2464, %v2394
      %v2466 = vadd.f32 %v2465, %v2398
      %v2467 = vadd.f32 %v2466, %v2402
      %v2468 = vadd.f32 %v2467, %v2406
      %v2469 = vadd.f32 %v2468, %v2410
      %v2470 = vadd.f32 %v2469, %v2414
      %v2471 = vadd.f32 %v2470, %v2418
      %v2472 = vadd.f32 %v2471, %v2422
      %v2473 = vadd.f32 %v2472, %v2426
      %v2474 = vadd.f32 %v2473, %v2430
      %v2475 = vadd.f32 %v2474, %v2434
      %v2476 = vadd.f32 %v2475, %v2438
      %v2477 = vrot.slane %v2476, 4
      %v2478 = vadd.f32 %v2476, %v2477
      %v2479 = vrot.slane %v2478, 2
      %v2480 = vadd.f32 %v2478, %v2479
      %v2481 = vrot.slane %v2480, 1
      %v2482 = vadd.f32 %v2480, %v2481
      %v2483 = vadd.f32 %v2379, %v2383
      %v2484 = vadd.f32 %v2483, %v2387
      %v2485 = vadd.f32 %v2484, %v2391
      %v2486 = vadd.f32 %v2485, %v2395
      %v2487 = vadd.f32 %v2486, %v2399
      %v2488 = vadd.f32 %v2487, %v2403
      %v2489 = vadd.f32 %v2488, %v2407
      %v2490 = vadd.f32 %v2489, %v2411
      %v2491 = vadd.f32 %v2490, %v2415
      %v2492 = vadd.f32 %v2491, %v2419
      %v2493 = vadd.f32 %v2492, %v2423
      %v2494 = vadd.f32 %v2493, %v2427
      %v2495 = vadd.f32 %v2494, %v2431
      %v2496 = vadd.f32 %v2495, %v2435
      %v2497 = vadd.f32 %v2496, %v2439
      %v2498 = vrot.slane %v2497, 4
      %v2499 = vadd.f32 %v2497, %v2498
      %v2500 = vrot.slane %v2499, 2
      %v2501 = vadd.f32 %v2499, %v2500
      %v2502 = vrot.slane %v2501, 1
      %v2503 = vadd.f32 %v2501, %v2502
      %v2504 = vadd.f32 %v2380, %v2384
      %v2505 = vadd.f32 %v2504, %v2388
      %v2506 = vadd.f32 %v2505, %v2392
      %v2507 = vadd.f32 %v2506, %v2396
      %v2508 = vadd.f32 %v2507, %v2400
      %v2509 = vadd.f32 %v2508, %v2404
      %v2510 = vadd.f32 %v2509, %v2408
      %v2511 = vadd.f32 %v2510, %v2412
      %v2512 = vadd.f32 %v2511, %v2416
      %v2513 = vadd.f32 %v2512, %v2420
      %v2514 = vadd.f32 %v2513, %v2424
      %v2515 = vadd.f32 %v2514, %v2428
      %v2516 = vadd.f32 %v2515, %v2432
      %v2517 = vadd.f32 %v2516, %v2436
      %v2518 = vadd.f32 %v2517, %v2440
      %v2519 = vrot.slane %v2518, 4
      %v2520 = vadd.f32 %v2518, %v2519
      %v2521 = vrot.slane %v2520, 2
      %v2522 = vadd.f32 %v2520, %v2521
      %v2523 = vrot.slane %v2522, 1
      %v2524 = vadd.f32 %v2522, %v2523
      %2526 = vset.pattern.permute.xlu0 0
      %2527 = vperm.xlu0 %2526, %v2296
      %v2528 = vpop.permute.xlu0 %2527
      %v2530 = vadd.f32 %v2461, %v2528
      %v2531 = vadd.f32 %v2482, %v2528
      %v2532 = vadd.f32 %v2503, %v2528
      %v2533 = vadd.f32 %v2524, %v2528
      %v2538 = vcombine.low %v2530, %v2531
      %v2539 = vcombine.low %v2532, %v2533
      %v2541 = vunpack.c.l.s4 1966171168
      %v2542 = vunpack.c.0.s8 %v2541
      %v2543 = vlaneseq
      %v2544 = vshrl.u32 %v2543, 7
      %v2545 = vsub.s32 %v2542, %v2544
      %v2546 = vrot.slane %v2538, %v2545
      %v2548 = vunpack.c.l.s4 1966171168
      %v2549 = vunpack.c.0.s8 %v2548
      %v2550 = vlaneseq
      %v2551 = vshrl.u32 %v2550, 7
      %v2552 = vsub.s32 %v2549, %v2551
      %v2553 = vrot.slane %v2539, %v2552
      %v2554 = vcombine.low %v2546, %v2553
      %v2556 = vunpack.c.l.s4 1966171168
      %v2557 = vunpack.c.0.s8 %v2556
      %v2558 = vlaneseq
      %v2559 = vshrl.u32 %v2558, 7
      %v2560 = vsub.s32 %v2557, %v2559
      %v2561 = vrot.slane %v2554, %v2560
      %v2563 = vlaneseq
      %vm2564 = vcmp.ge.s32.totalorder %v2563, 0
      %vm2565 = vcmp.lt.s32.totalorder %v2563, 512
      %vm2566 = vmand %vm2564, %vm2565
      %2567 = vst.msk [vmem:[%s170] sm:$0xf] %vm2566, %v2561
      %s2568 = smul.u32 4, %s14
      %p2569 = scmp.lt.s32.totalorder %s2568, 7
      %s2570 = scalar_select %p2569, %s2568, 7
      %s2571 = scalar_lea.vmem %s3, %s2570
      // Predicated region
      $region33: #{pinn_forward.1} parent=31 // pred_check
        %p2572 = pneg %p100
      $region34: #{pinn_forward.1} parent=31 // pred_check_branch
        %2574 = sbr.rel (%p2572) target = $region36
      $region35: #{pinn_forward.1} parent=31 // pred_region
        %s2575 = smul.u32 4, %s14
      $region36: #{pinn_forward.1} parent=31 // pred_fallthru
        _
    $region32: #{pinn_forward.1} parent=5 // pred_fallthru
      _
    %p2576 = scmp.le.s32.totalorder 2, %s9
    // Predicated region
    $region37: #{pinn_forward.1} parent=5 // pred_check
      %p2577 = pneg %p2576
    $region38: #{pinn_forward.1} parent=5 // pred_check_branch
      %2579 = sbr.rel (%p2577) target = $region40
    $region39: #{pinn_forward.1} parent=5 // pred_region
      %s2580 = ssub.s32 %s9, 2
      // Predicated region
      $region41: #{pinn_forward.1} parent=39 // pred_check
        %p2581 = pneg %p106
      $region42: #{pinn_forward.1} parent=39 // pred_check_branch
        %2583 = sbr.rel (%p2581) target = $region44
      $region43: #{pinn_forward.1} parent=39 // pred_region
        %s2584 = smul.u32 4, %s15
        %p2585 = scmp.lt.s32.totalorder %s2584, 7
        %s2586 = scalar_select %p2585, %s2584, 7
        %s2587 = scalar_lea.vmem %s3, %s2586
      $region44: #{pinn_forward.1} parent=39 // pred_fallthru
        _
    $region40: #{pinn_forward.1} parent=5 // pred_fallthru
      _
  $region6: #{pinn_forward.1} parent=0 // loop_footer
    %s13 = sadd.s32 1, %s9
  $region7: #{pinn_forward.1} parent=0 // loop_footer_branch
    %8 = sbr.rel target = $region3
  $region8: #{pinn_forward.1} parent=0 // loop_exit
    _

</llo_original>
